<compile_context>
chip_gen: v5e
topology: v5e:2x2
jax: 0.10.0
libtpu: 0.0.40
codegen_flags: <defaults>
</compile_context>

<pallas_src>
import functools
import math

import jax
import jax.numpy as jnp
from jax import lax
from jax.experimental import pallas as pl
from jax.experimental.pallas import tpu as pltpu


def _rsa_kernel(x_ref, ln_g_ref, ln_b_ref, wkv_ref, bkv_ref, *rest,
                b_blk, T, C, n_heads, use_fc, compute_dtype, exact_recip):
  if use_fc:
    w1_ref, b1_ref, w2_ref, b2_ref, o_ref = rest
  else:
    (o_ref,) = rest

  H = n_heads
  D = C // H
  R = b_blk * T

  x = x_ref[...]                                   # (R, C) f32 rows of block

  # ---- LayerNorm (eps = 1e-5, affine) over last dim, f32 vector math ----
  mu = jnp.mean(x, axis=-1, keepdims=True)
  xc = x - mu
  var = jnp.mean(xc * xc, axis=-1, keepdims=True)
  y = xc * lax.rsqrt(var + 1e-5)
  y = y * ln_g_ref[...] + ln_b_ref[...]            # (R, C) f32

  # ---- fused K/V projection (query is Identity); bf16 MXU, f32 accum ----
  y_c = y.astype(compute_dtype)
  kv = jnp.dot(y_c, wkv_ref[...],
               preferred_element_type=jnp.float32) + bkv_ref[...]   # (R, 2C)
  kv_c = kv.astype(compute_dtype)

  # ---- head split: (R, C) -> (G, T, D), G = n_heads*b_blk ----
  # Lane slices + leading-axis concat (reliably lowered by Mosaic); operands
  # are already in compute_dtype so the relayout moves half the bytes in bf16.
  def to_heads(a2d):
    a3 = a2d.reshape(b_blk, T, a2d.shape[-1])
    return jnp.concatenate(
        [a3[:, :, h * D:(h + 1) * D] for h in range(H)], axis=0)

  qg = to_heads(y_c)                               # (G, T, D)
  kg = to_heads(kv_c[:, :C])
  vg = to_heads(kv_c[:, C:])

  # logits[g, i, j] = key_i . query_j  (no 1/sqrt(D) scaling, per model.py)
  logits = jnp.einsum('gid,gjd->gij', kg, qg,
                      preferred_element_type=jnp.float32)           # (G, T, T)

  row = lax.broadcasted_iota(jnp.int32, (T, T), 0)
  col = lax.broadcasted_iota(jnp.int32, (T, T), 1)
  keep = (col <= row)[None, :, :]                  # causal mask, built once
  logits = jnp.where(keep, logits, -jnp.inf)

  m = jnp.max(logits, axis=-1, keepdims=True)
  p = jnp.exp(logits - m)
  denom = jnp.sum(p, axis=-1, keepdims=True)
  # EUP reciprocal frees the VPU slot; exact_recip=True restores bit parity.
  att = p * pl.reciprocal(denom, approx=not exact_recip)

  og = jnp.einsum('gij,gjd->gid', att.astype(compute_dtype), vg,
                  preferred_element_type=jnp.float32)               # (G, T, D)

  # merge heads back to (R, C)
  y_att = jnp.concatenate(
      [og[h * b_blk:(h + 1) * b_blk] for h in range(H)],
      axis=-1).reshape(R, C)

  # ---- optional MLP: fc1 -> exact GELU -> fc2 ----
  if use_fc:
    h1 = jnp.dot(y_att.astype(compute_dtype), w1_ref[...],
                 preferred_element_type=jnp.float32) + b1_ref[...]
    h1 = 0.5 * h1 * (1.0 + lax.erf(h1 / math.sqrt(2.0)))  # exact GELU, f32
    y_att = jnp.dot(h1.astype(compute_dtype), w2_ref[...],
                    preferred_element_type=jnp.float32) + b2_ref[...]

  # ---- residual ----
  o_ref[...] = (x + y_att).astype(o_ref.dtype)


def _derive_vmem_limit_bytes():
  """Generation-aware scoped-VMEM limit with headroom for compiler scratch."""
  cap = None
  try:
    cap = getattr(pltpu.get_tpu_info(), "vmem_capacity_bytes", None)
  except Exception:
    cap = None
  if not cap:
    cap = 64 << 20          # assume the smallest-VMEM generation (v7x)
  # v7x (64 MiB) -> 40 MiB; v5e/v6e (128 MiB) -> 96 MiB.
  return int(max(32 << 20, min(cap - (24 << 20), (3 * cap) // 4)))


def _pick_b_blk(B, T, C, n_heads, csz, use_fc, vmem_limit):
  """Largest divisor of B whose per-step VMEM footprint fits the budget."""
  w_elems = 2 * C * C + (4 * C * C if use_fc else 0)       # wkv (+ w1 + w2)
  resident = 2 * (w_elems * csz + 8 * C * 4)               # 2x: double-buffered
  budget = vmem_limit - resident - (4 << 20)               # compiler margin
  # Keep >= 2 grid steps so both v7x TensorCores get work from the single
  # "parallel" grid axis (near-free elsewhere: one extra ~0.35us step).
  cap = max(1, B // 2)
  best = 1
  for cand in range(1, B + 1):
    if B % cand or cand > cap:
      continue
    R, G = cand * T, cand * n_heads
    io_blocks = 2 * 2 * R * C * 4                # double-buffered x-in + out
    act = R * C * (6 * 4 + 6 * csz)              # LN / proj / MLP temporaries
    act += G * T * T * (2 * 4 + csz)             # logits / p / att scores
    if io_blocks + act <= budget:
      best = cand
  return best


def residual_self_attention(x, params, *, n_heads, use_fc=True, b_blk=None,
                            compute_dtype=jnp.bfloat16, exact_recip=False,
                            vmem_limit_bytes=None):
  B, T, C = x.shape
  assert C % n_heads == 0

  cdt = jnp.dtype(compute_dtype)
  csz = cdt.itemsize
  if vmem_limit_bytes is None:
    vmem_limit_bytes = _derive_vmem_limit_bytes()
  if b_blk is None:
    b_blk = _pick_b_blk(B, T, C, n_heads, csz, use_fc, vmem_limit_bytes)
  assert B % b_blk == 0, f"b_blk={b_blk} must divide B={B}"

  # Fuse K/V weights into one (C, 2C) operand; cast MXU weights to
  # compute_dtype (halves their DMA for bf16).  Biases stay f32.
  wkv = jnp.concatenate([params["wk"], params["wv"]], axis=-1).astype(cdt)
  bkv = jnp.concatenate([params["bk"], params["bv"]], axis=-1)

  operands = [x.reshape(B * T, C), params["ln_g"], params["ln_b"], wkv, bkv]
  if use_fc:
    operands += [params["w1"].astype(cdt), params["b1"],
                 params["w2"].astype(cdt), params["b2"]]

  kern = functools.partial(_rsa_kernel, b_blk=b_blk, T=T, C=C,
                           n_heads=n_heads, use_fc=use_fc, compute_dtype=cdt,
                           exact_recip=exact_recip)

  def const_spec(arr):
    # Grid-invariant block index: the pipeline keeps the weights resident and
    # does not re-DMA them between consecutive grid steps.
    nd = arr.ndim
    return pl.BlockSpec(arr.shape, lambda i, _nd=nd: (0,) * _nd)

  in_specs = [pl.BlockSpec((b_blk * T, C), lambda i: (i, 0))]
  in_specs += [const_spec(a) for a in operands[1:]]

  out = pl.pallas_call(
      kern,
      grid=(B // b_blk,),
      in_specs=in_specs,
      out_specs=pl.BlockSpec((b_blk * T, C), lambda i: (i, 0)),
      out_shape=jax.ShapeDtypeStruct((B * T, C), x.dtype),
      compiler_params=pltpu.CompilerParams(
          dimension_semantics=("parallel",),
          vmem_limit_bytes=int(vmem_limit_bytes)),
  )(*operands)
  return out.reshape(B, T, C)


# ------------- pure-JAX reference (mirrors the PyTorch code path) -------------
def ref_forward(x, p, n_heads, use_fc=True):
  B, T, C = x.shape
  D = C // n_heads
  mu = jnp.mean(x, -1, keepdims=True)
  var = jnp.mean((x - mu) ** 2, -1, keepdims=True)
  y = (x - mu) / jnp.sqrt(var + 1e-5) * p["ln_g"][0] + p["ln_b"][0]
  key = (y @ p["wk"] + p["bk"][0]).reshape(B, T, n_heads, D).transpose(0, 2, 1, 3)
  query = y.reshape(B, T, n_heads, D).transpose(0, 2, 1, 3)
  value = (y @ p["wv"] + p["bv"][0]).reshape(B, T, n_heads, D).transpose(0, 2, 1, 3)
  logits = key @ jnp.swapaxes(query, -1, -2)
  mask = jnp.tril(jnp.ones((T, T), jnp.float32))
  logits = jnp.where(mask == 0, -jnp.inf, logits)
  att = jax.nn.softmax(logits, -1)
  yy = (att @ value).transpose(0, 2, 1, 3).reshape(B, T, C)
  if use_fc:
    h1 = jax.nn.gelu(yy @ p["w1"] + p["b1"][0], approximate=False)
    yy = h1 @ p["w2"] + p["b2"][0]
  return x + yy


if __name__ == "__main__":
  B, T, C, n_heads = 4, 8, 32, 4
  use_fc = True

  key = jax.random.PRNGKey(0)
  ks = jax.random.split(key, 9)
  scale = 0.02
  params = {
      "ln_g": jnp.ones((1, C), jnp.float32),
      "ln_b": jnp.zeros((1, C), jnp.float32),
      # Linear weights stored as (in, out) == PyTorch weight.T
      "wk": scale * jax.random.normal(ks[0], (C, C), jnp.float32),
      "bk": scale * jax.random.normal(ks[1], (1, C), jnp.float32),
      "wv": scale * jax.random.normal(ks[2], (C, C), jnp.float32),
      "bv": scale * jax.random.normal(ks[3], (1, C), jnp.float32),
      "w1": scale * jax.random.normal(ks[4], (C, 2 * C), jnp.float32),
      "b1": scale * jax.random.normal(ks[5], (1, 2 * C), jnp.float32),
      "w2": scale * jax.random.normal(ks[6], (2 * C, C), jnp.float32),
      "b2": scale * jax.random.normal(ks[7], (1, C), jnp.float32),
  }
  x = jax.random.normal(ks[8], (B, T, C), jnp.float32)

  ref = ref_forward(x, params, n_heads, use_fc)

  # 1) exact-semantics path: f32 MXU operands, explicit b_blk=2 (grid=(2,)
  #    exercises the multi-step pipeline with grid-invariant weight blocks).
  out_f32 = residual_self_attention(x, params, n_heads=n_heads, use_fc=use_fc,
                                    b_blk=2, compute_dtype=jnp.float32)
  out_f32 = jax.block_until_ready(out_f32)
  assert out_f32.shape == (B, T, C)
  err_f32 = float(jnp.max(jnp.abs(out_f32 - ref)))
  # tolerance slightly relaxed vs pure f32 because the softmax denominator
  # uses the EUP approximate reciprocal (pl.reciprocal(approx=True)).
  assert jnp.allclose(out_f32, ref, rtol=2e-3, atol=2e-3), err_f32

  # 2) default fast path: bf16 MXU operands (f32 accumulation), auto b_blk and
  #    generation-aware vmem limit.
  out_bf16 = residual_self_attention(x, params, n_heads=n_heads, use_fc=use_fc)
  out_bf16 = jax.block_until_ready(out_bf16)
  assert out_bf16.shape == (B, T, C)
  err_bf16 = float(jnp.max(jnp.abs(out_bf16 - ref)))
  assert jnp.allclose(out_bf16, ref, rtol=2e-2, atol=2e-2), err_bf16

  print("KERNEL_OK")
</pallas_src>

<mosaic_0001>
module attributes {stable_mosaic.version = 11 : i64} {
  func.func @_rsa_kernel(%arg0: i32, %arg1: memref<16x32xf32, #tpu.memory_space<vmem>>, %arg2: memref<1x32xf32, #tpu.memory_space<vmem>>, %arg3: memref<1x32xf32, #tpu.memory_space<vmem>>, %arg4: memref<32x64xf32, #tpu.memory_space<vmem>>, %arg5: memref<1x64xf32, #tpu.memory_space<vmem>>, %arg6: memref<32x64xf32, #tpu.memory_space<vmem>>, %arg7: memref<1x64xf32, #tpu.memory_space<vmem>>, %arg8: memref<64x32xf32, #tpu.memory_space<vmem>>, %arg9: memref<1x32xf32, #tpu.memory_space<vmem>>, %arg10: memref<16x32xf32, #tpu.memory_space<vmem>>) attributes {dimension_semantics = [#tpu.dimension_semantics<parallel>], iteration_bounds = array<i64: 2>, scalar_prefetch = 0 : i64, scratch_operands = 0 : i64, tpu.core_type = #tpu.core_type<tc>, window_params = [{transform_indices = @transform_0, window_bounds = array<i64: 16, 32>}, {pipeline_mode = #tpu.pipeline_mode<synchronous>, transform_indices = @transform_1, window_bounds = array<i64: 1, 32>}, {pipeline_mode = #tpu.pipeline_mode<synchronous>, transform_indices = @transform_2, window_bounds = array<i64: 1, 32>}, {pipeline_mode = #tpu.pipeline_mode<synchronous>, transform_indices = @transform_3, window_bounds = array<i64: 32, 64>}, {pipeline_mode = #tpu.pipeline_mode<synchronous>, transform_indices = @transform_4, window_bounds = array<i64: 1, 64>}, {pipeline_mode = #tpu.pipeline_mode<synchronous>, transform_indices = @transform_5, window_bounds = array<i64: 32, 64>}, {pipeline_mode = #tpu.pipeline_mode<synchronous>, transform_indices = @transform_6, window_bounds = array<i64: 1, 64>}, {pipeline_mode = #tpu.pipeline_mode<synchronous>, transform_indices = @transform_7, window_bounds = array<i64: 64, 32>}, {pipeline_mode = #tpu.pipeline_mode<synchronous>, transform_indices = @transform_8, window_bounds = array<i64: 1, 32>}, {transform_indices = @transform_9, window_bounds = array<i64: 16, 32>}]} {
    %c0 = arith.constant 0 : index
    %c0_0 = arith.constant 0 : index
    %0 = vector.load %arg1[%c0, %c0_0] : memref<16x32xf32, #tpu.memory_space<vmem>>, vector<16x32xf32>
    %cst = arith.constant dense<0.000000e+00> : vector<16xf32>
    %1 = vector.multi_reduction <add>, %0, %cst [1] : vector<16x32xf32> to vector<16xf32>
    %2 = vector.shape_cast %1 : vector<16xf32> to vector<16x1xf32>
    %cst_1 = arith.constant 3.200000e+01 : f32
    %3 = vector.broadcast %cst_1 : f32 to vector<16x1xf32>
    %4 = arith.divf %2, %3 : vector<16x1xf32>
    %5 = vector.broadcast %4 : vector<16x1xf32> to vector<16x32xf32>
    %6 = arith.subf %0, %5 : vector<16x32xf32>
    %7 = arith.mulf %6, %6 : vector<16x32xf32>
    %cst_2 = arith.constant dense<0.000000e+00> : vector<16xf32>
    %8 = vector.multi_reduction <add>, %7, %cst_2 [1] : vector<16x32xf32> to vector<16xf32>
    %9 = vector.shape_cast %8 : vector<16xf32> to vector<16x1xf32>
    %cst_3 = arith.constant 3.200000e+01 : f32
    %10 = vector.broadcast %cst_3 : f32 to vector<16x1xf32>
    %11 = arith.divf %9, %10 : vector<16x1xf32>
    %cst_4 = arith.constant 9.99999974E-6 : f32
    %12 = vector.broadcast %cst_4 : f32 to vector<16x1xf32>
    %13 = arith.addf %11, %12 : vector<16x1xf32>
    %14 = math.rsqrt %13 : vector<16x1xf32>
    %15 = vector.broadcast %14 : vector<16x1xf32> to vector<16x32xf32>
    %16 = arith.mulf %6, %15 : vector<16x32xf32>
    %c0_5 = arith.constant 0 : index
    %c0_6 = arith.constant 0 : index
    %17 = vector.load %arg2[%c0_5, %c0_6] : memref<1x32xf32, #tpu.memory_space<vmem>>, vector<1x32xf32>
    %18 = vector.broadcast %17 : vector<1x32xf32> to vector<16x32xf32>
    %19 = arith.mulf %16, %18 : vector<16x32xf32>
    %c0_7 = arith.constant 0 : index
    %c0_8 = arith.constant 0 : index
    %20 = vector.load %arg3[%c0_7, %c0_8] : memref<1x32xf32, #tpu.memory_space<vmem>>, vector<1x32xf32>
    %21 = vector.broadcast %20 : vector<1x32xf32> to vector<16x32xf32>
    %22 = arith.addf %19, %21 : vector<16x32xf32>
    %c0_9 = arith.constant 0 : index
    %c0_10 = arith.constant 0 : index
    %23 = vector.load %arg4[%c0_9, %c0_10] : memref<32x64xf32, #tpu.memory_space<vmem>>, vector<32x64xf32>
    %cst_11 = arith.constant dense<0.000000e+00> : vector<16x64xf32>
    %24 = tpu.matmul %22, %23, %cst_11 {dimension_numbers = #tpu.dot_dimension_numbers<[1], [0], [0], [1], [0, 0, 1, 1], [], []>} : vector<16x32xf32>, vector<32x64xf32>, vector<16x64xf32> -> vector<16x64xf32>
    %c0_12 = arith.constant 0 : index
    %c0_13 = arith.constant 0 : index
    %25 = vector.load %arg5[%c0_12, %c0_13] : memref<1x64xf32, #tpu.memory_space<vmem>>, vector<1x64xf32>
    %26 = vector.broadcast %25 : vector<1x64xf32> to vector<16x64xf32>
    %27 = arith.addf %24, %26 : vector<16x64xf32>
    %28 = vector.shape_cast %22 : vector<16x32xf32> to vector<2x8x32xf32>
    %29 = vector.extract_strided_slice %28 {offsets = [0, 0, 0], sizes = [2, 8, 8], strides = [1, 1, 1]} : vector<2x8x32xf32> to vector<2x8x8xf32>
    %30 = vector.extract_strided_slice %28 {offsets = [0, 0, 8], sizes = [2, 8, 8], strides = [1, 1, 1]} : vector<2x8x32xf32> to vector<2x8x8xf32>
    %31 = vector.extract_strided_slice %28 {offsets = [0, 0, 16], sizes = [2, 8, 8], strides = [1, 1, 1]} : vector<2x8x32xf32> to vector<2x8x8xf32>
    %32 = vector.extract_strided_slice %28 {offsets = [0, 0, 24], sizes = [2, 8, 8], strides = [1, 1, 1]} : vector<2x8x32xf32> to vector<2x8x8xf32>
    %33 = tpu.concatenate %29, %30, %31, %32 in 0 : vector<2x8x8xf32>, vector<2x8x8xf32>, vector<2x8x8xf32>, vector<2x8x8xf32> -> vector<8x8x8xf32>
    %34 = vector.extract_strided_slice %27 {offsets = [0, 0], sizes = [16, 32], strides = [1, 1]} : vector<16x64xf32> to vector<16x32xf32>
    %35 = vector.shape_cast %34 : vector<16x32xf32> to vector<2x8x32xf32>
    %36 = vector.extract_strided_slice %35 {offsets = [0, 0, 0], sizes = [2, 8, 8], strides = [1, 1, 1]} : vector<2x8x32xf32> to vector<2x8x8xf32>
    %37 = vector.extract_strided_slice %35 {offsets = [0, 0, 8], sizes = [2, 8, 8], strides = [1, 1, 1]} : vector<2x8x32xf32> to vector<2x8x8xf32>
    %38 = vector.extract_strided_slice %35 {offsets = [0, 0, 16], sizes = [2, 8, 8], strides = [1, 1, 1]} : vector<2x8x32xf32> to vector<2x8x8xf32>
    %39 = vector.extract_strided_slice %35 {offsets = [0, 0, 24], sizes = [2, 8, 8], strides = [1, 1, 1]} : vector<2x8x32xf32> to vector<2x8x8xf32>
    %40 = tpu.concatenate %36, %37, %38, %39 in 0 : vector<2x8x8xf32>, vector<2x8x8xf32>, vector<2x8x8xf32>, vector<2x8x8xf32> -> vector<8x8x8xf32>
    %41 = vector.extract_strided_slice %27 {offsets = [0, 32], sizes = [16, 32], strides = [1, 1]} : vector<16x64xf32> to vector<16x32xf32>
    %42 = vector.shape_cast %41 : vector<16x32xf32> to vector<2x8x32xf32>
    %43 = vector.extract_strided_slice %42 {offsets = [0, 0, 0], sizes = [2, 8, 8], strides = [1, 1, 1]} : vector<2x8x32xf32> to vector<2x8x8xf32>
    %44 = vector.extract_strided_slice %42 {offsets = [0, 0, 8], sizes = [2, 8, 8], strides = [1, 1, 1]} : vector<2x8x32xf32> to vector<2x8x8xf32>
    %45 = vector.extract_strided_slice %42 {offsets = [0, 0, 16], sizes = [2, 8, 8], strides = [1, 1, 1]} : vector<2x8x32xf32> to vector<2x8x8xf32>
    %46 = vector.extract_strided_slice %42 {offsets = [0, 0, 24], sizes = [2, 8, 8], strides = [1, 1, 1]} : vector<2x8x32xf32> to vector<2x8x8xf32>
    %47 = tpu.concatenate %43, %44, %45, %46 in 0 : vector<2x8x8xf32>, vector<2x8x8xf32>, vector<2x8x8xf32>, vector<2x8x8xf32> -> vector<8x8x8xf32>
    "tpu.trace_start"() <{level = 10 : i32, message = "gid,gjd->gij"}> : () -> ()
    %cst_14 = arith.constant dense<0.000000e+00> : vector<8x8x8xf32>
    %48 = tpu.matmul %40, %33, %cst_14 {dimension_numbers = #tpu.dot_dimension_numbers<[2], [2], [1], [1], [0, 0, 0, 1, 1, 1], [0], [0]>} : vector<8x8x8xf32>, vector<8x8x8xf32>, vector<8x8x8xf32> -> vector<8x8x8xf32>
    "tpu.trace_stop"() : () -> ()
    %49 = tpu.iota {dimensions = array<i32: 0>} : vector<8x8xi32>
    %50 = tpu.iota {dimensions = array<i32: 1>} : vector<8x8xi32>
    %51 = arith.cmpi sle, %50, %49 : vector<8x8xi32>
    %52 = vector.shape_cast %51 : vector<8x8xi1> to vector<1x8x8xi1>
    %cst_15 = arith.constant 0xFF800000 : f32
    %53 = vector.shape_cast %52 : vector<1x8x8xi1> to vector<1x8x8xi1>
    %54 = vector.broadcast %53 : vector<1x8x8xi1> to vector<8x8x8xi1>
    %55 = vector.broadcast %cst_15 : f32 to vector<8x8x8xf32>
    %56 = arith.select %54, %48, %55 : vector<8x8x8xi1>, vector<8x8x8xf32>
    %cst_16 = arith.constant dense<0xFF800000> : vector<8x8xf32>
    %57 = vector.multi_reduction <maximumf>, %56, %cst_16 [2] : vector<8x8x8xf32> to vector<8x8xf32>
    %58 = vector.shape_cast %57 : vector<8x8xf32> to vector<8x8x1xf32>
    %59 = vector.broadcast %58 : vector<8x8x1xf32> to vector<8x8x8xf32>
    %60 = arith.subf %56, %59 : vector<8x8x8xf32>
    %61 = math.exp %60 : vector<8x8x8xf32>
    %cst_17 = arith.constant dense<0.000000e+00> : vector<8x8xf32>
    %62 = vector.multi_reduction <add>, %61, %cst_17 [2] : vector<8x8x8xf32> to vector<8x8xf32>
    %63 = vector.shape_cast %62 : vector<8x8xf32> to vector<8x8x1xf32>
    %64 = tpu.reciprocal %63 {approx = true} : vector<8x8x1xf32> -> vector<8x8x1xf32>
    %65 = vector.broadcast %64 : vector<8x8x1xf32> to vector<8x8x8xf32>
    %66 = arith.mulf %61, %65 : vector<8x8x8xf32>
    "tpu.trace_start"() <{level = 10 : i32, message = "gij,gjd->gid"}> : () -> ()
    %cst_18 = arith.constant dense<0.000000e+00> : vector<8x8x8xf32>
    %67 = tpu.matmul %66, %47, %cst_18 {dimension_numbers = #tpu.dot_dimension_numbers<[2], [1], [1], [2], [0, 0, 0, 1, 1, 2], [0], [0]>} : vector<8x8x8xf32>, vector<8x8x8xf32>, vector<8x8x8xf32> -> vector<8x8x8xf32>
    "tpu.trace_stop"() : () -> ()
    %68 = vector.extract_strided_slice %67 {offsets = [0, 0, 0], sizes = [2, 8, 8], strides = [1, 1, 1]} : vector<8x8x8xf32> to vector<2x8x8xf32>
    %69 = vector.extract_strided_slice %67 {offsets = [2, 0, 0], sizes = [2, 8, 8], strides = [1, 1, 1]} : vector<8x8x8xf32> to vector<2x8x8xf32>
    %70 = vector.extract_strided_slice %67 {offsets = [4, 0, 0], sizes = [2, 8, 8], strides = [1, 1, 1]} : vector<8x8x8xf32> to vector<2x8x8xf32>
    %71 = vector.extract_strided_slice %67 {offsets = [6, 0, 0], sizes = [2, 8, 8], strides = [1, 1, 1]} : vector<8x8x8xf32> to vector<2x8x8xf32>
    %72 = tpu.concatenate %68, %69, %70, %71 in 2 : vector<2x8x8xf32>, vector<2x8x8xf32>, vector<2x8x8xf32>, vector<2x8x8xf32> -> vector<2x8x32xf32>
    %73 = vector.shape_cast %72 : vector<2x8x32xf32> to vector<16x32xf32>
    %c0_19 = arith.constant 0 : index
    %c0_20 = arith.constant 0 : index
    %74 = vector.load %arg6[%c0_19, %c0_20] : memref<32x64xf32, #tpu.memory_space<vmem>>, vector<32x64xf32>
    %cst_21 = arith.constant dense<0.000000e+00> : vector<16x64xf32>
    %75 = tpu.matmul %73, %74, %cst_21 {dimension_numbers = #tpu.dot_dimension_numbers<[1], [0], [0], [1], [0, 0, 1, 1], [], []>} : vector<16x32xf32>, vector<32x64xf32>, vector<16x64xf32> -> vector<16x64xf32>
    %c0_22 = arith.constant 0 : index
    %c0_23 = arith.constant 0 : index
    %76 = vector.load %arg7[%c0_22, %c0_23] : memref<1x64xf32, #tpu.memory_space<vmem>>, vector<1x64xf32>
    %77 = vector.broadcast %76 : vector<1x64xf32> to vector<16x64xf32>
    %78 = arith.addf %75, %77 : vector<16x64xf32>
    %cst_24 = arith.constant 5.000000e-01 : f32
    %79 = vector.broadcast %cst_24 : f32 to vector<16x64xf32>
    %80 = arith.mulf %79, %78 : vector<16x64xf32>
    %cst_25 = arith.constant 1.41421354 : f32
    %81 = vector.broadcast %cst_25 : f32 to vector<16x64xf32>
    %82 = arith.divf %78, %81 : vector<16x64xf32>
    %83 = math.erf %82 : vector<16x64xf32>
    %cst_26 = arith.constant 1.000000e+00 : f32
    %84 = vector.broadcast %cst_26 : f32 to vector<16x64xf32>
    %85 = arith.addf %84, %83 : vector<16x64xf32>
    %86 = arith.mulf %80, %85 : vector<16x64xf32>
    %c0_27 = arith.constant 0 : index
    %c0_28 = arith.constant 0 : index
    %87 = vector.load %arg8[%c0_27, %c0_28] : memref<64x32xf32, #tpu.memory_space<vmem>>, vector<64x32xf32>
    %cst_29 = arith.constant dense<0.000000e+00> : vector<16x32xf32>
    %88 = tpu.matmul %86, %87, %cst_29 {dimension_numbers = #tpu.dot_dimension_numbers<[1], [0], [0], [1], [0, 0, 1, 1], [], []>} : vector<16x64xf32>, vector<64x32xf32>, vector<16x32xf32> -> vector<16x32xf32>
    %c0_30 = arith.constant 0 : index
    %c0_31 = arith.constant 0 : index
    %89 = vector.load %arg9[%c0_30, %c0_31] : memref<1x32xf32, #tpu.memory_space<vmem>>, vector<1x32xf32>
    %90 = vector.broadcast %89 : vector<1x32xf32> to vector<16x32xf32>
    %91 = arith.addf %88, %90 : vector<16x32xf32>
    %92 = arith.addf %0, %91 : vector<16x32xf32>
    %c0_32 = arith.constant 0 : index
    %c0_33 = arith.constant 0 : index
    %93 = vector.load %arg10[%c0_32, %c0_33] : memref<16x32xf32, #tpu.memory_space<vmem>>, vector<16x32xf32>
    tpu.vector_store %arg10[%c0_32, %c0_33], %92 {strides = array<i32>} : memref<16x32xf32, #tpu.memory_space<vmem>>, vector<16x32xf32>,
    return
  }
  func.func @transform_0(%arg0: i32) -> (i32, i32) {
    %c0_i32 = arith.constant 0 : i32
    %c0_i32_0 = arith.constant 0 : i32
    return %arg0, %c0_i32 : i32, i32
  }
  func.func @transform_1(%arg0: i32) -> (i32, i32) {
    %c0_i32 = arith.constant 0 : i32
    %c0_i32_0 = arith.constant 0 : i32
    %c0_i32_1 = arith.constant 0 : i32
    return %c0_i32, %c0_i32_0 : i32, i32
  }
  func.func @transform_2(%arg0: i32) -> (i32, i32) {
    %c0_i32 = arith.constant 0 : i32
    %c0_i32_0 = arith.constant 0 : i32
    %c0_i32_1 = arith.constant 0 : i32
    return %c0_i32, %c0_i32_0 : i32, i32
  }
  func.func @transform_3(%arg0: i32) -> (i32, i32) {
    %c0_i32 = arith.constant 0 : i32
    %c0_i32_0 = arith.constant 0 : i32
    %c0_i32_1 = arith.constant 0 : i32
    return %c0_i32, %c0_i32_0 : i32, i32
  }
  func.func @transform_4(%arg0: i32) -> (i32, i32) {
    %c0_i32 = arith.constant 0 : i32
    %c0_i32_0 = arith.constant 0 : i32
    %c0_i32_1 = arith.constant 0 : i32
    return %c0_i32, %c0_i32_0 : i32, i32
  }
  func.func @transform_5(%arg0: i32) -> (i32, i32) {
    %c0_i32 = arith.constant 0 : i32
    %c0_i32_0 = arith.constant 0 : i32
    %c0_i32_1 = arith.constant 0 : i32
    return %c0_i32, %c0_i32_0 : i32, i32
  }
  func.func @transform_6(%arg0: i32) -> (i32, i32) {
    %c0_i32 = arith.constant 0 : i32
    %c0_i32_0 = arith.constant 0 : i32
    %c0_i32_1 = arith.constant 0 : i32
    return %c0_i32, %c0_i32_0 : i32, i32
  }
  func.func @transform_7(%arg0: i32) -> (i32, i32) {
    %c0_i32 = arith.constant 0 : i32
    %c0_i32_0 = arith.constant 0 : i32
    %c0_i32_1 = arith.constant 0 : i32
    return %c0_i32, %c0_i32_0 : i32, i32
  }
  func.func @transform_8(%arg0: i32) -> (i32, i32) {
    %c0_i32 = arith.constant 0 : i32
    %c0_i32_0 = arith.constant 0 : i32
    %c0_i32_1 = arith.constant 0 : i32
    return %c0_i32, %c0_i32_0 : i32, i32
  }
  func.func @transform_9(%arg0: i32) -> (i32, i32) {
    %c0_i32 = arith.constant 0 : i32
    %c0_i32_0 = arith.constant 0 : i32
    return %arg0, %c0_i32 : i32, i32
  }
}

</mosaic_0001>

<llo_original>
// kernel: tpu_custom_call.1
$region0: #{tpu_custom_call.1}
  #allocation0 [shape = 'u32[]', space=smem, size = 0x4, offset = 0x4, fixed_abs, tag = 'smem constant byte address 0x4 - core index']
  #allocation1 [shape = 'u32[72,128]{1,0:T(1,128)}', space=vmem, size = 0x9000, scoped, tag = 'internal scratch']
  %s0 = inlined_call_operand.vmem [shape: f32[32,32], index: 0, kind: input, shape index: {}]
  %s1 = inlined_call_operand.hbm [shape: f32[1,32], index: 1, kind: input, shape index: {}]
  %s2 = inlined_call_operand.vmem [shape: f32[1,32], index: 2, kind: input, shape index: {}]
  %s3 = inlined_call_operand.vmem [shape: f32[32,64], index: 3, kind: input, shape index: {}]
  %s4 = inlined_call_operand.vmem [shape: f32[1,64], index: 4, kind: input, shape index: {}]
  %s5 = inlined_call_operand.vmem [shape: f32[32,64], index: 5, kind: input, shape index: {}]
  %s6 = inlined_call_operand.vmem [shape: f32[1,64], index: 6, kind: input, shape index: {}]
  %s7 = inlined_call_operand.vmem [shape: f32[64,32], index: 7, kind: input, shape index: {}]
  %s8 = inlined_call_operand.vmem [shape: f32[1,32], index: 8, kind: input, shape index: {}]
  %s9 = inlined_call_operand.hbm [shape: f32[32,32], index: 9, kind: output, shape index: {}]
  %s10 = sld [smem:[#allocation0]]
  $region73: #{tpu_custom_call.1} parent=0
    _
  %s12 = ssub.s32 1, %s10
  %s13 = scalar_select 0, %s12, %s10
  $region1: #{tpu_custom_call.1} parent=0
    #allocation2 [shape = 'u8[512]{0}', space=vmem, size = 0x400, scoped, tag = 'input window, operand 1, single buffered']
    #allocation3 [shape = 's32[2]{0}', space=sflag, size = 0x8, scoped, tag = 'scoped memory for tpu_custom_call.1']
    #allocation4 [shape = 's32[2]{0}', space=sflag, size = 0x8, scoped, tag = 'scoped memory for tpu_custom_call.1']
    #allocation5 [shape = 'u8[16384]{0}', space=vmem, size = 0x4000, scoped, tag = 'output window, operand 0']
    %14 = vsyncpa [#allocation3], 0
    %15 = vsyncpa [#allocation4], 0
    %s16 = scalar_lea.sflag [#allocation4], 1
    %17 = vsyncpa %s16, 0
    loop: start=0, step=1, limit=4
    $region2: #{tpu_custom_call.1} parent=1 // loop_pre_header
      _
    $region3: #{tpu_custom_call.1} parent=1 // loop_header
      %s19 = sphi 0, %s23
      %p20 = scmp.ge.s32.totalorder %s19, 4
      %s29 = sphi 0, %s31
      %s32 = sphi 0, %s29
      %s33 = sphi 0, %s32
      %s49 = sphi 0, %s33
      %s53 = sphi 0, %s53
      %s55 = sphi 0, %s53
      %s56 = sphi 0, %s55
      %s70 = sphi 0, %s56
      %s74 = sphi 0, %s74
      %s76 = sphi 0, %s74
      %s77 = sphi 0, %s76
      %s91 = sphi 0, %s77
      %s95 = sphi 0, %s95
      %s97 = sphi 0, %s95
      %s98 = sphi 0, %s97
      %s112 = sphi 0, %s98
      %s116 = sphi 0, %s116
      %s118 = sphi 0, %s116
      %s119 = sphi 0, %s118
      %s133 = sphi 0, %s119
      %s137 = sphi 0, %s137
      %s139 = sphi 0, %s137
      %s140 = sphi 0, %s139
      %s154 = sphi 0, %s140
      %s158 = sphi 0, %s158
      %s160 = sphi 0, %s158
      %s161 = sphi 0, %s160
      %s175 = sphi 0, %s161
      %s179 = sphi 0, %s179
      %s181 = sphi 0, %s179
      %s182 = sphi 0, %s181
      %s196 = sphi 0, %s182
      %s200 = sphi 0, %s200
      %s202 = sphi 0, %s200
      %s203 = sphi 0, %s202
      %s217 = sphi 0, %s203
      %s223 = sphi 0, %s225
      %s226 = sphi 0, %s223
      %s227 = sphi 0, %s226
      %s243 = sphi 0, %s227
    $region4: #{tpu_custom_call.1} parent=1 // loop_header_branch
      %22 = sbr.rel (%p20) target = $region8
    $region5: #{tpu_custom_call.1} parent=1 // loop_body
      %s24 = ssub.s32 %s19, 1
      %s25 = ssub.s32 %s19, 2
      %s26 = sadd.s32 %s19, 1
      %s27 = ssub.s32 %s19, %s26
      %p28 = scmp.eq.s32.totalorder %s27, 0
      %s30 = sadd.s32 %s29, 1
      %s31 = scalar_select %p28, %s29, %s30
      %p34 = pneg %p28
      %p35 = scmp.eq.s32.totalorder %s19, 1
      %p36 = por %p34, %p35
      %p37 = scmp.ne.s32.totalorder %s29, %s32
      %p38 = scmp.eq.s32.totalorder %s19, 0
      %p39 = por %p37, %p38
      %p40 = scmp.ne.s32.totalorder %s29, %s32
      %p41 = scmp.eq.s32.totalorder %s24, 1
      %p42 = por %p40, %p41
      %p43 = scmp.ne.s32.totalorder %s32, %s33
      %p44 = scmp.eq.s32.totalorder %s24, 0
      %p45 = por %p43, %p44
      %p46 = scmp.ne.s32.totalorder %s32, %s33
      %p47 = scmp.eq.s32.totalorder %s25, 1
      %p48 = por %p46, %p47
      %p50 = scmp.ne.s32.totalorder %s33, %s49
      %p51 = scmp.eq.s32.totalorder %s25, 0
      %p52 = por %p50, %p51
      %s54 = sadd.s32 %s53, 1
      %p57 = scmp.eq.s32.totalorder %s19, 1
      %p58 = scmp.ne.s32.totalorder %s53, %s55
      %p59 = scmp.eq.s32.totalorder %s19, 0
      %p60 = por %p58, %p59
      %p61 = scmp.ne.s32.totalorder %s53, %s55
      %p62 = scmp.eq.s32.totalorder %s24, 1
      %p63 = por %p61, %p62
      %p64 = scmp.ne.s32.totalorder %s55, %s56
      %p65 = scmp.eq.s32.totalorder %s24, 0
      %p66 = por %p64, %p65
      %p67 = scmp.ne.s32.totalorder %s55, %s56
      %p68 = scmp.eq.s32.totalorder %s25, 1
      %p69 = por %p67, %p68
      %p71 = scmp.ne.s32.totalorder %s56, %s70
      %p72 = scmp.eq.s32.totalorder %s25, 0
      %p73 = por %p71, %p72
      %s75 = sadd.s32 %s74, 1
      %p78 = scmp.eq.s32.totalorder %s19, 1
      %p79 = scmp.ne.s32.totalorder %s74, %s76
      %p80 = scmp.eq.s32.totalorder %s19, 0
      %p81 = por %p79, %p80
      %p82 = scmp.ne.s32.totalorder %s74, %s76
      %p83 = scmp.eq.s32.totalorder %s24, 1
      %p84 = por %p82, %p83
      %p85 = scmp.ne.s32.totalorder %s76, %s77
      %p86 = scmp.eq.s32.totalorder %s24, 0
      %p87 = por %p85, %p86
      %p88 = scmp.ne.s32.totalorder %s76, %s77
      %p89 = scmp.eq.s32.totalorder %s25, 1
      %p90 = por %p88, %p89
      %p92 = scmp.ne.s32.totalorder %s77, %s91
      %p93 = scmp.eq.s32.totalorder %s25, 0
      %p94 = por %p92, %p93
      %s96 = sadd.s32 %s95, 1
      %p99 = scmp.eq.s32.totalorder %s19, 1
      %p100 = scmp.ne.s32.totalorder %s95, %s97
      %p101 = scmp.eq.s32.totalorder %s19, 0
      %p102 = por %p100, %p101
      %p103 = scmp.ne.s32.totalorder %s95, %s97
      %p104 = scmp.eq.s32.totalorder %s24, 1
      %p105 = por %p103, %p104
      %p106 = scmp.ne.s32.totalorder %s97, %s98
      %p107 = scmp.eq.s32.totalorder %s24, 0
      %p108 = por %p106, %p107
      %p109 = scmp.ne.s32.totalorder %s97, %s98
      %p110 = scmp.eq.s32.totalorder %s25, 1
      %p111 = por %p109, %p110
      %p113 = scmp.ne.s32.totalorder %s98, %s112
      %p114 = scmp.eq.s32.totalorder %s25, 0
      %p115 = por %p113, %p114
      %s117 = sadd.s32 %s116, 1
      %p120 = scmp.eq.s32.totalorder %s19, 1
      %p121 = scmp.ne.s32.totalorder %s116, %s118
      %p122 = scmp.eq.s32.totalorder %s19, 0
      %p123 = por %p121, %p122
      %p124 = scmp.ne.s32.totalorder %s116, %s118
      %p125 = scmp.eq.s32.totalorder %s24, 1
      %p126 = por %p124, %p125
      %p127 = scmp.ne.s32.totalorder %s118, %s119
      %p128 = scmp.eq.s32.totalorder %s24, 0
      %p129 = por %p127, %p128
      %p130 = scmp.ne.s32.totalorder %s118, %s119
      %p131 = scmp.eq.s32.totalorder %s25, 1
      %p132 = por %p130, %p131
      %p134 = scmp.ne.s32.totalorder %s119, %s133
      %p135 = scmp.eq.s32.totalorder %s25, 0
      %p136 = por %p134, %p135
      %s138 = sadd.s32 %s137, 1
      %p141 = scmp.eq.s32.totalorder %s19, 1
      %p142 = scmp.ne.s32.totalorder %s137, %s139
      %p143 = scmp.eq.s32.totalorder %s19, 0
      %p144 = por %p142, %p143
      %p145 = scmp.ne.s32.totalorder %s137, %s139
      %p146 = scmp.eq.s32.totalorder %s24, 1
      %p147 = por %p145, %p146
      %p148 = scmp.ne.s32.totalorder %s139, %s140
      %p149 = scmp.eq.s32.totalorder %s24, 0
      %p150 = por %p148, %p149
      %p151 = scmp.ne.s32.totalorder %s139, %s140
      %p152 = scmp.eq.s32.totalorder %s25, 1
      %p153 = por %p151, %p152
      %p155 = scmp.ne.s32.totalorder %s140, %s154
      %p156 = scmp.eq.s32.totalorder %s25, 0
      %p157 = por %p155, %p156
      %s159 = sadd.s32 %s158, 1
      %p162 = scmp.eq.s32.totalorder %s19, 1
      %p163 = scmp.ne.s32.totalorder %s158, %s160
      %p164 = scmp.eq.s32.totalorder %s19, 0
      %p165 = por %p163, %p164
      %p166 = scmp.ne.s32.totalorder %s158, %s160
      %p167 = scmp.eq.s32.totalorder %s24, 1
      %p168 = por %p166, %p167
      %p169 = scmp.ne.s32.totalorder %s160, %s161
      %p170 = scmp.eq.s32.totalorder %s24, 0
      %p171 = por %p169, %p170
      %p172 = scmp.ne.s32.totalorder %s160, %s161
      %p173 = scmp.eq.s32.totalorder %s25, 1
      %p174 = por %p172, %p173
      %p176 = scmp.ne.s32.totalorder %s161, %s175
      %p177 = scmp.eq.s32.totalorder %s25, 0
      %p178 = por %p176, %p177
      %s180 = sadd.s32 %s179, 1
      %p183 = scmp.eq.s32.totalorder %s19, 1
      %p184 = scmp.ne.s32.totalorder %s179, %s181
      %p185 = scmp.eq.s32.totalorder %s19, 0
      %p186 = por %p184, %p185
      %p187 = scmp.ne.s32.totalorder %s179, %s181
      %p188 = scmp.eq.s32.totalorder %s24, 1
      %p189 = por %p187, %p188
      %p190 = scmp.ne.s32.totalorder %s181, %s182
      %p191 = scmp.eq.s32.totalorder %s24, 0
      %p192 = por %p190, %p191
      %p193 = scmp.ne.s32.totalorder %s181, %s182
      %p194 = scmp.eq.s32.totalorder %s25, 1
      %p195 = por %p193, %p194
      %p197 = scmp.ne.s32.totalorder %s182, %s196
      %p198 = scmp.eq.s32.totalorder %s25, 0
      %p199 = por %p197, %p198
      %s201 = sadd.s32 %s200, 1
      %p204 = scmp.eq.s32.totalorder %s19, 1
      %p205 = scmp.ne.s32.totalorder %s200, %s202
      %p206 = scmp.eq.s32.totalorder %s19, 0
      %p207 = por %p205, %p206
      %p208 = scmp.ne.s32.totalorder %s200, %s202
      %p209 = scmp.eq.s32.totalorder %s24, 1
      %p210 = por %p208, %p209
      %p211 = scmp.ne.s32.totalorder %s202, %s203
      %p212 = scmp.eq.s32.totalorder %s24, 0
      %p213 = por %p211, %p212
      %p214 = scmp.ne.s32.totalorder %s202, %s203
      %p215 = scmp.eq.s32.totalorder %s25, 1
      %p216 = por %p214, %p215
      %p218 = scmp.ne.s32.totalorder %s203, %s217
      %p219 = scmp.eq.s32.totalorder %s25, 0
      %p220 = por %p218, %p219
      %s221 = ssub.s32 %s19, %s26
      %p222 = scmp.eq.s32.totalorder %s221, 0
      %s224 = sadd.s32 %s223, 1
      %s225 = scalar_select %p222, %s223, %s224
      %p228 = pneg %p222
      %p229 = scmp.eq.s32.totalorder %s19, 1
      %p230 = por %p228, %p229
      %p231 = scmp.ne.s32.totalorder %s223, %s226
      %p232 = scmp.eq.s32.totalorder %s19, 0
      %p233 = por %p231, %p232
      %p234 = scmp.ne.s32.totalorder %s223, %s226
      %p235 = scmp.eq.s32.totalorder %s24, 1
      %p236 = por %p234, %p235
      %p237 = scmp.ne.s32.totalorder %s226, %s227
      %p238 = scmp.eq.s32.totalorder %s24, 0
      %p239 = por %p237, %p238
      %p240 = scmp.ne.s32.totalorder %s226, %s227
      %p241 = scmp.eq.s32.totalorder %s25, 1
      %p242 = por %p240, %p241
      %p244 = scmp.ne.s32.totalorder %s227, %s243
      %p245 = scmp.eq.s32.totalorder %s25, 0
      %p246 = por %p244, %p245
      %p247 = scmp.le.s32.totalorder 1, %s19
      %p248 = scmp.lt.s32.totalorder %s19, 3
      %p249 = pnand %p247, %p248
      %p250 = pneg %p249
      // Predicated region
      $region9: #{tpu_custom_call.1} parent=5 // pred_check
        _
      $region10: #{tpu_custom_call.1} parent=5 // pred_check_branch
        %252 = sbr.rel (%p249) target = $region12
      $region11: #{tpu_custom_call.1} parent=5 // pred_region
        %s253 = ssub.s32 %s19, 1
        // Predicated region
        $region13: #{tpu_custom_call.1} parent=11 // pred_check
          %p254 = pneg %p66
        $region14: #{tpu_custom_call.1} parent=11 // pred_check_branch
          %256 = sbr.rel (%p254) target = $region16
        $region15: #{tpu_custom_call.1} parent=11 // pred_region
          %258 = vsyncadd [#allocation3], 0
          %s260 = sshll.u32 %s1, 4
          %s261 = int_to_ptr.hbm [resolvable:$true] %s260
          %s262 = sshll.u32 [#allocation2], 4
          %s263 = int_to_ptr.vmem [resolvable:$true] %s262
          %265 = dma.hbm_to_vmem [thread:$0]  %s261, 16, %s263, [#allocation3]
        $region16: #{tpu_custom_call.1} parent=11 // pred_fallthru
          _
        // Predicated region
        $region17: #{tpu_custom_call.1} parent=11 // pred_check
          %p266 = pneg %p87
        $region18: #{tpu_custom_call.1} parent=11 // pred_check_branch
          %268 = sbr.rel (%p266) target = $region20
        $region19: #{tpu_custom_call.1} parent=11 // pred_region
          _
        $region20: #{tpu_custom_call.1} parent=11 // pred_fallthru
          _
        // Predicated region
        $region21: #{tpu_custom_call.1} parent=11 // pred_check
          %p269 = pneg %p108
        $region22: #{tpu_custom_call.1} parent=11 // pred_check_branch
          %271 = sbr.rel (%p269) target = $region24
        $region23: #{tpu_custom_call.1} parent=11 // pred_region
          _
        $region24: #{tpu_custom_call.1} parent=11 // pred_fallthru
          _
        // Predicated region
        $region25: #{tpu_custom_call.1} parent=11 // pred_check
          %p272 = pneg %p129
        $region26: #{tpu_custom_call.1} parent=11 // pred_check_branch
          %274 = sbr.rel (%p272) target = $region28
        $region27: #{tpu_custom_call.1} parent=11 // pred_region
          _
        $region28: #{tpu_custom_call.1} parent=11 // pred_fallthru
          _
        // Predicated region
        $region29: #{tpu_custom_call.1} parent=11 // pred_check
          %p275 = pneg %p150
        $region30: #{tpu_custom_call.1} parent=11 // pred_check_branch
          %277 = sbr.rel (%p275) target = $region32
        $region31: #{tpu_custom_call.1} parent=11 // pred_region
          _
        $region32: #{tpu_custom_call.1} parent=11 // pred_fallthru
          _
        // Predicated region
        $region33: #{tpu_custom_call.1} parent=11 // pred_check
          %p278 = pneg %p171
        $region34: #{tpu_custom_call.1} parent=11 // pred_check_branch
          %280 = sbr.rel (%p278) target = $region36
        $region35: #{tpu_custom_call.1} parent=11 // pred_region
          _
        $region36: #{tpu_custom_call.1} parent=11 // pred_fallthru
          _
        // Predicated region
        $region37: #{tpu_custom_call.1} parent=11 // pred_check
          %p281 = pneg %p192
        $region38: #{tpu_custom_call.1} parent=11 // pred_check_branch
          %283 = sbr.rel (%p281) target = $region40
        $region39: #{tpu_custom_call.1} parent=11 // pred_region
          _
        $region40: #{tpu_custom_call.1} parent=11 // pred_fallthru
          _
        // Predicated region
        $region41: #{tpu_custom_call.1} parent=11 // pred_check
          %p284 = pneg %p213
        $region42: #{tpu_custom_call.1} parent=11 // pred_check_branch
          %286 = sbr.rel (%p284) target = $region44
        $region43: #{tpu_custom_call.1} parent=11 // pred_region
          _
        $region44: #{tpu_custom_call.1} parent=11 // pred_fallthru
          _
      $region12: #{tpu_custom_call.1} parent=5 // pred_fallthru
        _
      %p287 = scmp.lt.s32.totalorder %s19, 2
      // Predicated region
      $region45: #{tpu_custom_call.1} parent=5 // pred_check
        %p288 = pneg %p287
      $region46: #{tpu_custom_call.1} parent=5 // pred_check_branch
        %290 = sbr.rel (%p288) target = $region48
      $region47: #{tpu_custom_call.1} parent=5 // pred_region
        // Predicated region
        $region49: #{tpu_custom_call.1} parent=47 // pred_check
          %p291 = pneg %p39
        $region50: #{tpu_custom_call.1} parent=47 // pred_check_branch
          %293 = sbr.rel (%p291) target = $region52
        $region51: #{tpu_custom_call.1} parent=47 // pred_region
          %s294 = smul.u32 2, %s19
          %p295 = scmp.lt.s32.totalorder %s294, 3
          %s296 = scalar_select %p295, %s294, 3
          %s297 = smul.addr %s296, 8
          %s298 = scalar_lea.vmem %s0, %s297
          %s299 = smul.u32 2, %s19
        $region52: #{tpu_custom_call.1} parent=47 // pred_fallthru
          _
      $region48: #{tpu_custom_call.1} parent=5 // pred_fallthru
        _
      %p300 = scmp.le.s32.totalorder 1, %s19
      %p301 = scmp.lt.s32.totalorder %s19, 3
      %p302 = pnand %p300, %p301
      %p303 = pneg %p302
      // Predicated region
      $region53: #{tpu_custom_call.1} parent=5 // pred_check
        _
      $region54: #{tpu_custom_call.1} parent=5 // pred_check_branch
        %305 = sbr.rel (%p302) target = $region56
      $region55: #{tpu_custom_call.1} parent=5 // pred_region
        %s306 = ssub.s32 %s19, 1
        // Predicated region
        $region57: #{tpu_custom_call.1} parent=55 // pred_check
          %p307 = pneg %p66
        $region58: #{tpu_custom_call.1} parent=55 // pred_check_branch
          %309 = sbr.rel (%p307) target = $region60
        $region59: #{tpu_custom_call.1} parent=55 // pred_region
          %311 = dma.done [#allocation3], 16
        $region60: #{tpu_custom_call.1} parent=55 // pred_fallthru
          _
        %s312 = smul.u32 2, %s24
        %p313 = scmp.lt.s32.totalorder %s312, 3
        %s314 = scalar_select %p313, %s312, 3
        %s315 = smul.addr %s314, 8
        %s316 = scalar_lea.vmem %s0, %s315
        %p317 = pneg %p45
        %p318 = pneg %p42
        %p319 = pneg %p66
        %p320 = pneg %p63
        %p321 = pneg %p87
        %p322 = pneg %p84
        %p323 = pneg %p108
        %p324 = pneg %p105
        %p325 = pneg %p129
        %p326 = pneg %p126
        %p327 = pneg %p150
        %p328 = pneg %p147
        %p329 = pneg %p171
        %p330 = pneg %p168
        %p331 = pneg %p192
        %p332 = pneg %p189
        %p333 = pneg %p213
        %p334 = pneg %p210
        %p335 = pneg %p239
        %p336 = pneg %p236
        %s337 = sand.u32 %s226, 1
        %s338 = scalar_lea.sflag [#allocation4], %s337
        %s339 = sand.u32 %s226, 1
        %s340 = smul.addr %s339, 16
        %s341 = scalar_lea.vmem [#allocation5], %s340
        %s342 = smul.u32 2, %s24
        %p343 = scmp.lt.s32.totalorder %s342, 3
        %s344 = scalar_select %p343, %s342, 3
        %s345 = smul.addr %s344, 8
        %s346 = scalar_lea.vmem %s0, %s345
        %s347 = smul.u32 2, %s24
        %s348 = smul.u32 2, %s24
        %v349 = vld [vmem:[%s346] sm:$0xff]
        %v350 = vld [vmem:[%s346 + $0x8] sm:$0xff]
        %vm351 = vcmask 261120
        %v352 = vsel %vm351, %v349, 0.0
        %353 = vadd.xlane.f32.xlu0 %v352
        %v354 = vpop.xlane.xlu0 %353
        %v355 = vsel %vm351, %v350, 0.0
        %356 = vadd.xlane.f32.xlu0 %v355
        %v357 = vpop.xlane.xlu0 %356
        %v358 = vrcp.pop 32.0
        %v359 = vmul.f32 32.0, %v358
        %v360 = vsub.f32 1.0, %v359
        %v361 = vmul.f32 %v358, %v360
        %v362 = vadd.f32 %v358, %v361
        %vm363 = vweird.f32 %v358
        %v364 = vsel %vm363, %v358, %v362
        %v365 = vmul.f32 %v354, %v364
        %v366 = vmul.f32 %v357, %v364
        %v367 = vsub.f32 %v349, %v365
        %v368 = vsub.f32 %v350, %v366
        %v369 = vmul.f32 %v367, %v367
        %v370 = vmul.f32 %v368, %v368
        %v371 = vsel %vm351, %v369, 0.0
        %372 = vadd.xlane.f32.xlu0 %v371
        %v373 = vpop.xlane.xlu0 %372
        %v374 = vsel %vm351, %v370, 0.0
        %375 = vadd.xlane.f32.xlu0 %v374
        %v376 = vpop.xlane.xlu0 %375
        %v377 = vmul.f32 %v373, %v364
        %v378 = vmul.f32 %v376, %v364
        %v379 = vadd.f32 %v377, 1e-05
        %v380 = vadd.f32 %v378, 1e-05
        %v381 = vrsqrt.pop %v379
        %v382 = vmul.f32 %v381, %v379
        %v383 = vmul.f32 %v382, %v381
        %v384 = vmul.f32 0.5, %v383
        %v385 = vsub.f32 1.5, %v384
        %v386 = vmul.f32 %v381, %v385
        %vm387 = vweird.f32 %v379
        %vm388 = vweird.f32 %v381
        %vm389 = vmor %vm387, %vm388
        %v390 = vsel %vm389, %v381, %v386
        %v391 = vrsqrt.pop %v380
        %v392 = vmul.f32 %v391, %v380
        %v393 = vmul.f32 %v392, %v391
        %v394 = vmul.f32 0.5, %v393
        %v395 = vsub.f32 1.5, %v394
        %v396 = vmul.f32 %v391, %v395
        %vm397 = vweird.f32 %v380
        %vm398 = vweird.f32 %v391
        %vm399 = vmor %vm397, %vm398
        %v400 = vsel %vm399, %v391, %v396
        %v401 = vmul.f32 %v367, %v390
        %v402 = vmul.f32 %v368, %v400
        %v403 = vld [vmem:[#allocation2] sm:$0x1]
        %v405 = vperm.slane %v403, 0
        %v407 = vmul.f32 %v401, %v405
        %v408 = vmul.f32 %v402, %v405
        %v409 = vld [vmem:[%s2] sm:$0x1]
        %v411 = vperm.slane %v409, 0
        %v413 = vadd.f32 %v407, %v411
        %v414 = vadd.f32 %v408, %v411
        %v415 = vld [vmem:[%s3] sm:$0xff]
        %v416 = vld [vmem:[%s3 + $0x8] sm:$0xff]
        %v417 = vld [vmem:[%s3 + $0x10] sm:$0xff]
        %v418 = vld [vmem:[%s3 + $0x18] sm:$0xff]
        %v419 = vld [vmem:[%s4] sm:$0x1]
        %v421 = vperm.slane %v419, 0
        %v424 = vsel %vm351, %v413, 0
        %v427 = vsel %vm351, %v414, 0
        %429 = vmatpush.msra.mxu0 0.0
        %430 = vmatpush.msra.mxu0 0.0
        %431 = vmatpush.msra.mxu0 0.0
        %432 = vmatpush.msra.mxu0 0.0
        %433 = vmatpush.msra.mxu0 0.0
        %434 = vmatpush.msra.mxu0 0.0
        %435 = vmatpush.msra.mxu0 0.0
        %436 = vmatpush.msra.mxu0 0.0
        %437 = vmatpush.msra.mxu0 0.0
        %438 = vmatpush.msra.mxu0 0.0
        %439 = vmatpush.msra.mxu0 0.0
        %440 = vmatpush.msra.mxu0 0.0
        %441 = vmatpush.msra.mxu0 %v418
        %442 = vmatpush.msra.mxu0 %v417
        %443 = vmatpush.msra.mxu0 %v416
        %444 = vmatpush.msra.mxu0 %v415
        %445 = vmatmul.f32.gmra.mxu0 %v424
        %v446 = vpop.f32.mrf.mxu0
        %v447 = vadd.f32 %v421, %v446
        %448 = vmatmul.f32.gmra.mxu0 %v427
        %v449 = vpop.f32.mrf.mxu0
        %v450 = vadd.f32 %v421, %v449
        %451 = vdwg.mxu0
        %452 = vrot.lane.b32.xlu0 %v413, 120
        %v453 = vpop.permute.xlu0 %452
        %454 = vrot.lane.b32.xlu0 %v414, 120
        %v455 = vpop.permute.xlu0 %454
        %456 = vrot.lane.b32.xlu0 %v413, 112
        %v457 = vpop.permute.xlu0 %456
        %458 = vrot.lane.b32.xlu0 %v414, 112
        %v459 = vpop.permute.xlu0 %458
        %460 = vrot.lane.b32.xlu0 %v413, 104
        %v461 = vpop.permute.xlu0 %460
        %462 = vrot.lane.b32.xlu0 %v414, 104
        %v463 = vpop.permute.xlu0 %462
        %466 = vrot.lane.b32.xlu0 %v447, 120
        %v467 = vpop.permute.xlu0 %466
        %468 = vrot.lane.b32.xlu0 %v450, 120
        %v469 = vpop.permute.xlu0 %468
        %470 = vrot.lane.b32.xlu0 %v447, 112
        %v471 = vpop.permute.xlu0 %470
        %472 = vrot.lane.b32.xlu0 %v450, 112
        %v473 = vpop.permute.xlu0 %472
        %474 = vrot.lane.b32.xlu0 %v447, 104
        %v475 = vpop.permute.xlu0 %474
        %476 = vrot.lane.b32.xlu0 %v450, 104
        %v477 = vpop.permute.xlu0 %476
        %vm478 = vcmask 64512
        %v479 = vsel %vm478, %v447, 0
        %v481 = vsel %vm478, %v413, 0
        %483 = vmatpush.xpose.msra.mxu0 0.0
        %484 = vmatpush.xpose.msra.mxu0 0.0
        %485 = vmatpush.xpose.msra.mxu0 0.0
        %486 = vmatpush.xpose.msra.mxu0 0.0
        %487 = vmatpush.xpose.msra.mxu0 0.0
        %488 = vmatpush.xpose.msra.mxu0 0.0
        %489 = vmatpush.xpose.msra.mxu0 0.0
        %490 = vmatpush.xpose.msra.mxu0 0.0
        %491 = vmatpush.xpose.msra.mxu0 0.0
        %492 = vmatpush.xpose.msra.mxu0 0.0
        %493 = vmatpush.xpose.msra.mxu0 0.0
        %494 = vmatpush.xpose.msra.mxu0 0.0
        %495 = vmatpush.xpose.msra.mxu0 0.0
        %496 = vmatpush.xpose.msra.mxu0 0.0
        %497 = vmatpush.xpose.msra.mxu0 0.0
        %498 = vmatpush.xpose.msra.mxu0 %v481
        %499 = vmatmul.f32.gmra.mxu0 %v479
        %v500 = vpop.f32.mrf.mxu0
        %v501 = vadd.f32 0.0, %v500
        %502 = vdwg.mxu0
        %v503 = vsel %vm478, %v450, 0
        %v505 = vsel %vm478, %v414, 0
        %507 = vmatpush.xpose.msra.mxu0 0.0
        %508 = vmatpush.xpose.msra.mxu0 0.0
        %509 = vmatpush.xpose.msra.mxu0 0.0
        %510 = vmatpush.xpose.msra.mxu0 0.0
        %511 = vmatpush.xpose.msra.mxu0 0.0
        %512 = vmatpush.xpose.msra.mxu0 0.0
        %513 = vmatpush.xpose.msra.mxu0 0.0
        %514 = vmatpush.xpose.msra.mxu0 0.0
        %515 = vmatpush.xpose.msra.mxu0 0.0
        %516 = vmatpush.xpose.msra.mxu0 0.0
        %517 = vmatpush.xpose.msra.mxu0 0.0
        %518 = vmatpush.xpose.msra.mxu0 0.0
        %519 = vmatpush.xpose.msra.mxu0 0.0
        %520 = vmatpush.xpose.msra.mxu0 0.0
        %521 = vmatpush.xpose.msra.mxu0 0.0
        %522 = vmatpush.xpose.msra.mxu0 %v505
        %523 = vmatmul.f32.gmra.mxu0 %v503
        %v524 = vpop.f32.mrf.mxu0
        %v525 = vadd.f32 0.0, %v524
        %526 = vdwg.mxu0
        %v527 = vsel %vm478, %v467, 0
        %v529 = vsel %vm478, %v453, 0
        %531 = vmatpush.xpose.msra.mxu0 0.0
        %532 = vmatpush.xpose.msra.mxu0 0.0
        %533 = vmatpush.xpose.msra.mxu0 0.0
        %534 = vmatpush.xpose.msra.mxu0 0.0
        %535 = vmatpush.xpose.msra.mxu0 0.0
        %536 = vmatpush.xpose.msra.mxu0 0.0
        %537 = vmatpush.xpose.msra.mxu0 0.0
        %538 = vmatpush.xpose.msra.mxu0 0.0
        %539 = vmatpush.xpose.msra.mxu0 0.0
        %540 = vmatpush.xpose.msra.mxu0 0.0
        %541 = vmatpush.xpose.msra.mxu0 0.0
        %542 = vmatpush.xpose.msra.mxu0 0.0
        %543 = vmatpush.xpose.msra.mxu0 0.0
        %544 = vmatpush.xpose.msra.mxu0 0.0
        %545 = vmatpush.xpose.msra.mxu0 0.0
        %546 = vmatpush.xpose.msra.mxu0 %v529
        %547 = vmatmul.f32.gmra.mxu0 %v527
        %v548 = vpop.f32.mrf.mxu0
        %v549 = vadd.f32 0.0, %v548
        %550 = vdwg.mxu0
        %v551 = vsel %vm478, %v469, 0
        %v553 = vsel %vm478, %v455, 0
        %555 = vmatpush.xpose.msra.mxu0 0.0
        %556 = vmatpush.xpose.msra.mxu0 0.0
        %557 = vmatpush.xpose.msra.mxu0 0.0
        %558 = vmatpush.xpose.msra.mxu0 0.0
        %559 = vmatpush.xpose.msra.mxu0 0.0
        %560 = vmatpush.xpose.msra.mxu0 0.0
        %561 = vmatpush.xpose.msra.mxu0 0.0
        %562 = vmatpush.xpose.msra.mxu0 0.0
        %563 = vmatpush.xpose.msra.mxu0 0.0
        %564 = vmatpush.xpose.msra.mxu0 0.0
        %565 = vmatpush.xpose.msra.mxu0 0.0
        %566 = vmatpush.xpose.msra.mxu0 0.0
        %567 = vmatpush.xpose.msra.mxu0 0.0
        %568 = vmatpush.xpose.msra.mxu0 0.0
        %569 = vmatpush.xpose.msra.mxu0 0.0
        %570 = vmatpush.xpose.msra.mxu0 %v553
        %571 = vmatmul.f32.gmra.mxu0 %v551
        %v572 = vpop.f32.mrf.mxu0
        %v573 = vadd.f32 0.0, %v572
        %574 = vdwg.mxu0
        %v575 = vsel %vm478, %v471, 0
        %v577 = vsel %vm478, %v457, 0
        %579 = vmatpush.xpose.msra.mxu0 0.0
        %580 = vmatpush.xpose.msra.mxu0 0.0
        %581 = vmatpush.xpose.msra.mxu0 0.0
        %582 = vmatpush.xpose.msra.mxu0 0.0
        %583 = vmatpush.xpose.msra.mxu0 0.0
        %584 = vmatpush.xpose.msra.mxu0 0.0
        %585 = vmatpush.xpose.msra.mxu0 0.0
        %586 = vmatpush.xpose.msra.mxu0 0.0
        %587 = vmatpush.xpose.msra.mxu0 0.0
        %588 = vmatpush.xpose.msra.mxu0 0.0
        %589 = vmatpush.xpose.msra.mxu0 0.0
        %590 = vmatpush.xpose.msra.mxu0 0.0
        %591 = vmatpush.xpose.msra.mxu0 0.0
        %592 = vmatpush.xpose.msra.mxu0 0.0
        %593 = vmatpush.xpose.msra.mxu0 0.0
        %594 = vmatpush.xpose.msra.mxu0 %v577
        %595 = vmatmul.f32.gmra.mxu0 %v575
        %v596 = vpop.f32.mrf.mxu0
        %v597 = vadd.f32 0.0, %v596
        %598 = vdwg.mxu0
        %v599 = vsel %vm478, %v473, 0
        %v601 = vsel %vm478, %v459, 0
        %603 = vmatpush.xpose.msra.mxu0 0.0
        %604 = vmatpush.xpose.msra.mxu0 0.0
        %605 = vmatpush.xpose.msra.mxu0 0.0
        %606 = vmatpush.xpose.msra.mxu0 0.0
        %607 = vmatpush.xpose.msra.mxu0 0.0
        %608 = vmatpush.xpose.msra.mxu0 0.0
        %609 = vmatpush.xpose.msra.mxu0 0.0
        %610 = vmatpush.xpose.msra.mxu0 0.0
        %611 = vmatpush.xpose.msra.mxu0 0.0
        %612 = vmatpush.xpose.msra.mxu0 0.0
        %613 = vmatpush.xpose.msra.mxu0 0.0
        %614 = vmatpush.xpose.msra.mxu0 0.0
        %615 = vmatpush.xpose.msra.mxu0 0.0
        %616 = vmatpush.xpose.msra.mxu0 0.0
        %617 = vmatpush.xpose.msra.mxu0 0.0
        %618 = vmatpush.xpose.msra.mxu0 %v601
        %619 = vmatmul.f32.gmra.mxu0 %v599
        %v620 = vpop.f32.mrf.mxu0
        %v621 = vadd.f32 0.0, %v620
        %622 = vdwg.mxu0
        %v623 = vsel %vm478, %v475, 0
        %v625 = vsel %vm478, %v461, 0
        %627 = vmatpush.xpose.msra.mxu0 0.0
        %628 = vmatpush.xpose.msra.mxu0 0.0
        %629 = vmatpush.xpose.msra.mxu0 0.0
        %630 = vmatpush.xpose.msra.mxu0 0.0
        %631 = vmatpush.xpose.msra.mxu0 0.0
        %632 = vmatpush.xpose.msra.mxu0 0.0
        %633 = vmatpush.xpose.msra.mxu0 0.0
        %634 = vmatpush.xpose.msra.mxu0 0.0
        %635 = vmatpush.xpose.msra.mxu0 0.0
        %636 = vmatpush.xpose.msra.mxu0 0.0
        %637 = vmatpush.xpose.msra.mxu0 0.0
        %638 = vmatpush.xpose.msra.mxu0 0.0
        %639 = vmatpush.xpose.msra.mxu0 0.0
        %640 = vmatpush.xpose.msra.mxu0 0.0
        %641 = vmatpush.xpose.msra.mxu0 0.0
        %642 = vmatpush.xpose.msra.mxu0 %v625
        %643 = vmatmul.f32.gmra.mxu0 %v623
        %v644 = vpop.f32.mrf.mxu0
        %v645 = vadd.f32 0.0, %v644
        %646 = vdwg.mxu0
        %v647 = vsel %vm478, %v477, 0
        %v649 = vsel %vm478, %v463, 0
        %651 = vmatpush.xpose.msra.mxu0 0.0
        %652 = vmatpush.xpose.msra.mxu0 0.0
        %653 = vmatpush.xpose.msra.mxu0 0.0
        %654 = vmatpush.xpose.msra.mxu0 0.0
        %655 = vmatpush.xpose.msra.mxu0 0.0
        %656 = vmatpush.xpose.msra.mxu0 0.0
        %657 = vmatpush.xpose.msra.mxu0 0.0
        %658 = vmatpush.xpose.msra.mxu0 0.0
        %659 = vmatpush.xpose.msra.mxu0 0.0
        %660 = vmatpush.xpose.msra.mxu0 0.0
        %661 = vmatpush.xpose.msra.mxu0 0.0
        %662 = vmatpush.xpose.msra.mxu0 0.0
        %663 = vmatpush.xpose.msra.mxu0 0.0
        %664 = vmatpush.xpose.msra.mxu0 0.0
        %665 = vmatpush.xpose.msra.mxu0 0.0
        %666 = vmatpush.xpose.msra.mxu0 %v649
        %667 = vmatmul.f32.gmra.mxu0 %v647
        %v668 = vpop.f32.mrf.mxu0
        %v669 = vadd.f32 0.0, %v668
        %670 = vdwg.mxu0
        %v671 = vlaneseq
        %v672 = vshrl.u32 %v671, 7
        %v673 = vlaneseq
        %v674 = vand.u32 %v673, 127
        %vm675 = vcmp.le.s32.totalorder %v674, %v672
        %v676 = vsel %vm675, 1, 0
        %vm677 = vcmp.eq.s32.totalorder %v676, 1
        %v678 = vsel %vm677, %v501, -inf
        %v679 = vsel %vm677, %v525, -inf
        %v680 = vsel %vm677, %v549, -inf
        %v681 = vsel %vm677, %v573, -inf
        %v682 = vsel %vm677, %v597, -inf
        %v683 = vsel %vm677, %v621, -inf
        %v684 = vsel %vm677, %v645, -inf
        %v685 = vsel %vm677, %v669, -inf
        %v686 = vsel %vm478, %v678, -inf
        %687 = vmax.xlane.f32.xlu0 %v686
        %v688 = vpop.xlane.xlu0 %687
        %v689 = vsel %vm478, %v679, -inf
        %690 = vmax.xlane.f32.xlu0 %v689
        %v691 = vpop.xlane.xlu0 %690
        %v692 = vsel %vm478, %v680, -inf
        %693 = vmax.xlane.f32.xlu0 %v692
        %v694 = vpop.xlane.xlu0 %693
        %v695 = vsel %vm478, %v681, -inf
        %696 = vmax.xlane.f32.xlu0 %v695
        %v697 = vpop.xlane.xlu0 %696
        %v698 = vsel %vm478, %v682, -inf
        %699 = vmax.xlane.f32.xlu0 %v698
        %v700 = vpop.xlane.xlu0 %699
        %v701 = vsel %vm478, %v683, -inf
        %702 = vmax.xlane.f32.xlu0 %v701
        %v703 = vpop.xlane.xlu0 %702
        %v704 = vsel %vm478, %v684, -inf
        %705 = vmax.xlane.f32.xlu0 %v704
        %v706 = vpop.xlane.xlu0 %705
        %v707 = vsel %vm478, %v685, -inf
        %708 = vmax.xlane.f32.xlu0 %v707
        %v709 = vpop.xlane.xlu0 %708
        %v710 = vsub.f32 %v678, %v688
        %v711 = vsub.f32 %v679, %v691
        %v712 = vsub.f32 %v680, %v694
        %v713 = vsub.f32 %v681, %v697
        %v714 = vsub.f32 %v682, %v700
        %v715 = vsub.f32 %v683, %v703
        %v716 = vsub.f32 %v684, %v706
        %v717 = vsub.f32 %v685, %v709
        %v718 = vmul.f32 %v710, 1.442695
        %v719 = vpow.pop %v718
        %v720 = vmul.f32 %v711, 1.442695
        %v721 = vpow.pop %v720
        %v722 = vmul.f32 %v712, 1.442695
        %v723 = vpow.pop %v722
        %v724 = vmul.f32 %v713, 1.442695
        %v725 = vpow.pop %v724
        %v726 = vmul.f32 %v714, 1.442695
        %v727 = vpow.pop %v726
        %v728 = vmul.f32 %v715, 1.442695
        %v729 = vpow.pop %v728
        %v730 = vmul.f32 %v716, 1.442695
        %v731 = vpow.pop %v730
        %v732 = vmul.f32 %v717, 1.442695
        %v733 = vpow.pop %v732
        %v734 = vsel %vm478, %v719, 0.0
        %735 = vadd.xlane.f32.xlu0 %v734
        %v736 = vpop.xlane.xlu0 %735
        %v737 = vsel %vm478, %v721, 0.0
        %738 = vadd.xlane.f32.xlu0 %v737
        %v739 = vpop.xlane.xlu0 %738
        %v740 = vsel %vm478, %v723, 0.0
        %741 = vadd.xlane.f32.xlu0 %v740
        %v742 = vpop.xlane.xlu0 %741
        %v743 = vsel %vm478, %v725, 0.0
        %744 = vadd.xlane.f32.xlu0 %v743
        %v745 = vpop.xlane.xlu0 %744
        %v746 = vsel %vm478, %v727, 0.0
        %747 = vadd.xlane.f32.xlu0 %v746
        %v748 = vpop.xlane.xlu0 %747
        %v749 = vsel %vm478, %v729, 0.0
        %750 = vadd.xlane.f32.xlu0 %v749
        %v751 = vpop.xlane.xlu0 %750
        %v752 = vsel %vm478, %v731, 0.0
        %753 = vadd.xlane.f32.xlu0 %v752
        %v754 = vpop.xlane.xlu0 %753
        %v755 = vsel %vm478, %v733, 0.0
        %756 = vadd.xlane.f32.xlu0 %v755
        %v757 = vpop.xlane.xlu0 %756
        %v758 = vrcp.pop %v736
        %v759 = vrcp.pop %v739
        %v760 = vrcp.pop %v742
        %v761 = vrcp.pop %v745
        %v762 = vrcp.pop %v748
        %v763 = vrcp.pop %v751
        %v764 = vrcp.pop %v754
        %v765 = vrcp.pop %v757
        %v766 = vmul.f32 %v719, %v758
        %v767 = vmul.f32 %v721, %v759
        %v768 = vmul.f32 %v723, %v760
        %v769 = vmul.f32 %v725, %v761
        %v770 = vmul.f32 %v727, %v762
        %v771 = vmul.f32 %v729, %v763
        %v772 = vmul.f32 %v731, %v764
        %v773 = vmul.f32 %v733, %v765
        %774 = vrot.lane.b32.xlu0 %v447, 96
        %v775 = vpop.permute.xlu0 %774
        %v778 = vsel %vm478, %v766, 0
        %780 = vmatpush.msra.mxu0 0.0
        %781 = vmatpush.msra.mxu0 0.0
        %782 = vmatpush.msra.mxu0 0.0
        %783 = vmatpush.msra.mxu0 0.0
        %784 = vmatpush.msra.mxu0 0.0
        %785 = vmatpush.msra.mxu0 0.0
        %786 = vmatpush.msra.mxu0 0.0
        %787 = vmatpush.msra.mxu0 0.0
        %788 = vmatpush.msra.mxu0 0.0
        %789 = vmatpush.msra.mxu0 0.0
        %790 = vmatpush.msra.mxu0 0.0
        %791 = vmatpush.msra.mxu0 0.0
        %792 = vmatpush.msra.mxu0 0.0
        %793 = vmatpush.msra.mxu0 0.0
        %794 = vmatpush.msra.mxu0 0.0
        %795 = vmatpush.msra.mxu0 %v775
        %796 = vmatmul.f32.gmra.mxu0 %v778
        %v797 = vpop.f32.mrf.mxu0
        %v798 = vadd.f32 0.0, %v797
        %799 = vdwg.mxu0
        %800 = vrot.lane.b32.xlu0 %v450, 96
        %v801 = vpop.permute.xlu0 %800
        %v804 = vsel %vm478, %v767, 0
        %806 = vmatpush.msra.mxu0 0.0
        %807 = vmatpush.msra.mxu0 0.0
        %808 = vmatpush.msra.mxu0 0.0
        %809 = vmatpush.msra.mxu0 0.0
        %810 = vmatpush.msra.mxu0 0.0
        %811 = vmatpush.msra.mxu0 0.0
        %812 = vmatpush.msra.mxu0 0.0
        %813 = vmatpush.msra.mxu0 0.0
        %814 = vmatpush.msra.mxu0 0.0
        %815 = vmatpush.msra.mxu0 0.0
        %816 = vmatpush.msra.mxu0 0.0
        %817 = vmatpush.msra.mxu0 0.0
        %818 = vmatpush.msra.mxu0 0.0
        %819 = vmatpush.msra.mxu0 0.0
        %820 = vmatpush.msra.mxu0 0.0
        %821 = vmatpush.msra.mxu0 %v801
        %822 = vmatmul.f32.gmra.mxu0 %v804
        %v823 = vpop.f32.mrf.mxu0
        %v824 = vadd.f32 0.0, %v823
        %825 = vdwg.mxu0
        %826 = vrot.lane.b32.xlu0 %v467, 96
        %v827 = vpop.permute.xlu0 %826
        %v830 = vsel %vm478, %v768, 0
        %832 = vmatpush.msra.mxu0 0.0
        %833 = vmatpush.msra.mxu0 0.0
        %834 = vmatpush.msra.mxu0 0.0
        %835 = vmatpush.msra.mxu0 0.0
        %836 = vmatpush.msra.mxu0 0.0
        %837 = vmatpush.msra.mxu0 0.0
        %838 = vmatpush.msra.mxu0 0.0
        %839 = vmatpush.msra.mxu0 0.0
        %840 = vmatpush.msra.mxu0 0.0
        %841 = vmatpush.msra.mxu0 0.0
        %842 = vmatpush.msra.mxu0 0.0
        %843 = vmatpush.msra.mxu0 0.0
        %844 = vmatpush.msra.mxu0 0.0
        %845 = vmatpush.msra.mxu0 0.0
        %846 = vmatpush.msra.mxu0 0.0
        %847 = vmatpush.msra.mxu0 %v827
        %848 = vmatmul.f32.gmra.mxu0 %v830
        %v849 = vpop.f32.mrf.mxu0
        %v850 = vadd.f32 0.0, %v849
        %851 = vdwg.mxu0
        %852 = vrot.lane.b32.xlu0 %v469, 96
        %v853 = vpop.permute.xlu0 %852
        %v856 = vsel %vm478, %v769, 0
        %858 = vmatpush.msra.mxu0 0.0
        %859 = vmatpush.msra.mxu0 0.0
        %860 = vmatpush.msra.mxu0 0.0
        %861 = vmatpush.msra.mxu0 0.0
        %862 = vmatpush.msra.mxu0 0.0
        %863 = vmatpush.msra.mxu0 0.0
        %864 = vmatpush.msra.mxu0 0.0
        %865 = vmatpush.msra.mxu0 0.0
        %866 = vmatpush.msra.mxu0 0.0
        %867 = vmatpush.msra.mxu0 0.0
        %868 = vmatpush.msra.mxu0 0.0
        %869 = vmatpush.msra.mxu0 0.0
        %870 = vmatpush.msra.mxu0 0.0
        %871 = vmatpush.msra.mxu0 0.0
        %872 = vmatpush.msra.mxu0 0.0
        %873 = vmatpush.msra.mxu0 %v853
        %874 = vmatmul.f32.gmra.mxu0 %v856
        %v875 = vpop.f32.mrf.mxu0
        %v876 = vadd.f32 0.0, %v875
        %877 = vdwg.mxu0
        %878 = vrot.lane.b32.xlu0 %v471, 96
        %v879 = vpop.permute.xlu0 %878
        %v882 = vsel %vm478, %v770, 0
        %884 = vmatpush.msra.mxu0 0.0
        %885 = vmatpush.msra.mxu0 0.0
        %886 = vmatpush.msra.mxu0 0.0
        %887 = vmatpush.msra.mxu0 0.0
        %888 = vmatpush.msra.mxu0 0.0
        %889 = vmatpush.msra.mxu0 0.0
        %890 = vmatpush.msra.mxu0 0.0
        %891 = vmatpush.msra.mxu0 0.0
        %892 = vmatpush.msra.mxu0 0.0
        %893 = vmatpush.msra.mxu0 0.0
        %894 = vmatpush.msra.mxu0 0.0
        %895 = vmatpush.msra.mxu0 0.0
        %896 = vmatpush.msra.mxu0 0.0
        %897 = vmatpush.msra.mxu0 0.0
        %898 = vmatpush.msra.mxu0 0.0
        %899 = vmatpush.msra.mxu0 %v879
        %900 = vmatmul.f32.gmra.mxu0 %v882
        %v901 = vpop.f32.mrf.mxu0
        %v902 = vadd.f32 0.0, %v901
        %903 = vdwg.mxu0
        %904 = vrot.lane.b32.xlu0 %v473, 96
        %v905 = vpop.permute.xlu0 %904
        %v908 = vsel %vm478, %v771, 0
        %910 = vmatpush.msra.mxu0 0.0
        %911 = vmatpush.msra.mxu0 0.0
        %912 = vmatpush.msra.mxu0 0.0
        %913 = vmatpush.msra.mxu0 0.0
        %914 = vmatpush.msra.mxu0 0.0
        %915 = vmatpush.msra.mxu0 0.0
        %916 = vmatpush.msra.mxu0 0.0
        %917 = vmatpush.msra.mxu0 0.0
        %918 = vmatpush.msra.mxu0 0.0
        %919 = vmatpush.msra.mxu0 0.0
        %920 = vmatpush.msra.mxu0 0.0
        %921 = vmatpush.msra.mxu0 0.0
        %922 = vmatpush.msra.mxu0 0.0
        %923 = vmatpush.msra.mxu0 0.0
        %924 = vmatpush.msra.mxu0 0.0
        %925 = vmatpush.msra.mxu0 %v905
        %926 = vmatmul.f32.gmra.mxu0 %v908
        %v927 = vpop.f32.mrf.mxu0
        %v928 = vadd.f32 0.0, %v927
        %929 = vdwg.mxu0
        %930 = vrot.lane.b32.xlu0 %v475, 96
        %v931 = vpop.permute.xlu0 %930
        %v934 = vsel %vm478, %v772, 0
        %936 = vmatpush.msra.mxu0 0.0
        %937 = vmatpush.msra.mxu0 0.0
        %938 = vmatpush.msra.mxu0 0.0
        %939 = vmatpush.msra.mxu0 0.0
        %940 = vmatpush.msra.mxu0 0.0
        %941 = vmatpush.msra.mxu0 0.0
        %942 = vmatpush.msra.mxu0 0.0
        %943 = vmatpush.msra.mxu0 0.0
        %944 = vmatpush.msra.mxu0 0.0
        %945 = vmatpush.msra.mxu0 0.0
        %946 = vmatpush.msra.mxu0 0.0
        %947 = vmatpush.msra.mxu0 0.0
        %948 = vmatpush.msra.mxu0 0.0
        %949 = vmatpush.msra.mxu0 0.0
        %950 = vmatpush.msra.mxu0 0.0
        %951 = vmatpush.msra.mxu0 %v931
        %952 = vmatmul.f32.gmra.mxu0 %v934
        %v953 = vpop.f32.mrf.mxu0
        %v954 = vadd.f32 0.0, %v953
        %955 = vdwg.mxu0
        %956 = vrot.lane.b32.xlu0 %v477, 96
        %v957 = vpop.permute.xlu0 %956
        %v960 = vsel %vm478, %v773, 0
        %962 = vmatpush.msra.mxu0 0.0
        %963 = vmatpush.msra.mxu0 0.0
        %964 = vmatpush.msra.mxu0 0.0
        %965 = vmatpush.msra.mxu0 0.0
        %966 = vmatpush.msra.mxu0 0.0
        %967 = vmatpush.msra.mxu0 0.0
        %968 = vmatpush.msra.mxu0 0.0
        %969 = vmatpush.msra.mxu0 0.0
        %970 = vmatpush.msra.mxu0 0.0
        %971 = vmatpush.msra.mxu0 0.0
        %972 = vmatpush.msra.mxu0 0.0
        %973 = vmatpush.msra.mxu0 0.0
        %974 = vmatpush.msra.mxu0 0.0
        %975 = vmatpush.msra.mxu0 0.0
        %976 = vmatpush.msra.mxu0 0.0
        %977 = vmatpush.msra.mxu0 %v957
        %978 = vmatmul.f32.gmra.mxu0 %v960
        %v979 = vpop.f32.mrf.mxu0
        %v980 = vadd.f32 0.0, %v979
        %981 = vdwg.mxu0
        %984 = vrot.lane.b32.xlu0 %v850, 8
        %v985 = vpop.permute.xlu0 %984
        %986 = vrot.lane.b32.xlu0 %v876, 8
        %v987 = vpop.permute.xlu0 %986
        %992 = vrot.lane.b32.xlu0 %v902, 16
        %v993 = vpop.permute.xlu0 %992
        %994 = vrot.lane.b32.xlu0 %v928, 16
        %v995 = vpop.permute.xlu0 %994
        %1000 = vrot.lane.b32.xlu0 %v954, 24
        %v1001 = vpop.permute.xlu0 %1000
        %1002 = vrot.lane.b32.xlu0 %v980, 24
        %v1003 = vpop.permute.xlu0 %1002
        %v1006 = vsel %vm478, %v798, %v985
        %v1007 = vsel %vm478, %v824, %v987
        %vm1008 = vcmask 130048
        %v1009 = vsel %vm1008, %v1006, %v993
        %v1010 = vsel %vm1008, %v1007, %v995
        %vm1011 = vcmask 195584
        %v1012 = vsel %vm1011, %v1009, %v1001
        %v1013 = vsel %vm1011, %v1010, %v1003
        %v1014 = vld [vmem:[%s5] sm:$0xff]
        %v1015 = vld [vmem:[%s5 + $0x8] sm:$0xff]
        %v1016 = vld [vmem:[%s5 + $0x10] sm:$0xff]
        %v1017 = vld [vmem:[%s5 + $0x18] sm:$0xff]
        %v1018 = vld [vmem:[%s6] sm:$0x1]
        %v1020 = vperm.slane %v1018, 0
        %v1023 = vsel %vm351, %v1012, 0
        %v1026 = vsel %vm351, %v1013, 0
        %1028 = vmatpush.msra.mxu0 0.0
        %1029 = vmatpush.msra.mxu0 0.0
        %1030 = vmatpush.msra.mxu0 0.0
        %1031 = vmatpush.msra.mxu0 0.0
        %1032 = vmatpush.msra.mxu0 0.0
        %1033 = vmatpush.msra.mxu0 0.0
        %1034 = vmatpush.msra.mxu0 0.0
        %1035 = vmatpush.msra.mxu0 0.0
        %1036 = vmatpush.msra.mxu0 0.0
        %1037 = vmatpush.msra.mxu0 0.0
        %1038 = vmatpush.msra.mxu0 0.0
        %1039 = vmatpush.msra.mxu0 0.0
        %1040 = vmatpush.msra.mxu0 %v1017
        %1041 = vmatpush.msra.mxu0 %v1016
        %1042 = vmatpush.msra.mxu0 %v1015
        %1043 = vmatpush.msra.mxu0 %v1014
        %1044 = vmatmul.f32.gmra.mxu0 %v1023
        %v1045 = vpop.f32.mrf.mxu0
        %v1046 = vadd.f32 %v1020, %v1045
        %1047 = vmatmul.f32.gmra.mxu0 %v1026
        %v1048 = vpop.f32.mrf.mxu0
        %v1049 = vadd.f32 %v1020, %v1048
        %1050 = vdwg.mxu0
        %v1051 = vmul.f32 %v1046, 0.5
        %v1052 = vmul.f32 %v1049, 0.5
        %v1053 = vrcp.pop 1.4142135
        %v1054 = vmul.f32 1.4142135, %v1053
        %v1055 = vsub.f32 1.0, %v1054
        %v1056 = vmul.f32 %v1053, %v1055
        %v1057 = vadd.f32 %v1053, %v1056
        %vm1058 = vweird.f32 %v1053
        %v1059 = vsel %vm1058, %v1053, %v1057
        %v1060 = vmul.f32 %v1046, %v1059
        %v1061 = vmul.f32 %v1049, %v1059
        %v1062 = vmul.f32 %v1060, %v1060
        %v1063 = vmin.f32 16.0, %v1062
        %v1064 = vmul.f32 %v1063, 2.1237322e-06
        %v1065 = vadd.f32 %v1064, 0.00028619796
        %v1066 = vmul.f32 %v1063, %v1065
        %v1067 = vadd.f32 %v1066, 0.0036580483
        %v1068 = vmul.f32 %v1063, %v1067
        %v1069 = vadd.f32 %v1068, 0.05243302
        %v1070 = vmul.f32 %v1063, %v1069
        %v1071 = vadd.f32 %v1070, 0.18741608
        %v1072 = vmul.f32 %v1063, %v1071
        %v1073 = vadd.f32 %v1072, 1.1283791
        %v1074 = vmul.f32 %v1060, %v1073
        %v1075 = vmul.f32 %v1063, 3.8918573e-05
        %v1076 = vadd.f32 %v1075, 0.001143296
        %v1077 = vmul.f32 %v1063, %v1076
        %v1078 = vadd.f32 %v1077, 0.014752088
        %v1079 = vmul.f32 %v1063, %v1078
        %v1080 = vadd.f32 %v1079, 0.112945676
        %v1081 = vmul.f32 %v1063, %v1080
        %v1082 = vadd.f32 %v1081, 0.4994258
        %v1083 = vmul.f32 %v1063, %v1082
        %v1084 = vadd.f32 %v1083, 1.0
        %v1085 = vrcp.pop %v1084
        %v1086 = vmul.f32 %v1084, %v1085
        %v1087 = vsub.f32 1.0, %v1086
        %v1088 = vmul.f32 %v1085, %v1087
        %v1089 = vadd.f32 %v1085, %v1088
        %vm1090 = vweird.f32 %v1084
        %vm1091 = vweird.f32 %v1085
        %vm1092 = vmor %vm1090, %vm1091
        %v1093 = vsel %vm1092, %v1085, %v1089
        %v1094 = vand.u32 2147483647, %v1084
        %vm1095 = vcmp.eq.f32.partialorder %v1094, 8.507059e+37
        %v1096 = vand.u32 %v1084, 2147483648
        %v1097 = vor.u32 1.1754944e-38, %v1096
        %v1098 = vsel %vm1095, %v1097, %v1093
        %v1099 = vmul.f32 %v1074, %v1098
        %v1100 = vmin.f32 %v1099, 1.0
        %v1101 = vmax.f32 %v1100, -1.0
        %v1102 = vmul.f32 %v1061, %v1061
        %v1103 = vmin.f32 16.0, %v1102
        %v1104 = vmul.f32 %v1103, 2.1237322e-06
        %v1105 = vadd.f32 %v1104, 0.00028619796
        %v1106 = vmul.f32 %v1103, %v1105
        %v1107 = vadd.f32 %v1106, 0.0036580483
        %v1108 = vmul.f32 %v1103, %v1107
        %v1109 = vadd.f32 %v1108, 0.05243302
        %v1110 = vmul.f32 %v1103, %v1109
        %v1111 = vadd.f32 %v1110, 0.18741608
        %v1112 = vmul.f32 %v1103, %v1111
        %v1113 = vadd.f32 %v1112, 1.1283791
        %v1114 = vmul.f32 %v1061, %v1113
        %v1115 = vmul.f32 %v1103, 3.8918573e-05
        %v1116 = vadd.f32 %v1115, 0.001143296
        %v1117 = vmul.f32 %v1103, %v1116
        %v1118 = vadd.f32 %v1117, 0.014752088
        %v1119 = vmul.f32 %v1103, %v1118
        %v1120 = vadd.f32 %v1119, 0.112945676
        %v1121 = vmul.f32 %v1103, %v1120
        %v1122 = vadd.f32 %v1121, 0.4994258
        %v1123 = vmul.f32 %v1103, %v1122
        %v1124 = vadd.f32 %v1123, 1.0
        %v1125 = vrcp.pop %v1124
        %v1126 = vmul.f32 %v1124, %v1125
        %v1127 = vsub.f32 1.0, %v1126
        %v1128 = vmul.f32 %v1125, %v1127
        %v1129 = vadd.f32 %v1125, %v1128
        %vm1130 = vweird.f32 %v1124
        %vm1131 = vweird.f32 %v1125
        %vm1132 = vmor %vm1130, %vm1131
        %v1133 = vsel %vm1132, %v1125, %v1129
        %v1134 = vand.u32 2147483647, %v1124
        %vm1135 = vcmp.eq.f32.partialorder %v1134, 8.507059e+37
        %v1136 = vand.u32 %v1124, 2147483648
        %v1137 = vor.u32 1.1754944e-38, %v1136
        %v1138 = vsel %vm1135, %v1137, %v1133
        %v1139 = vmul.f32 %v1114, %v1138
        %v1140 = vmin.f32 %v1139, 1.0
        %v1141 = vmax.f32 %v1140, -1.0
        %v1142 = vadd.f32 %v1101, 1.0
        %v1143 = vadd.f32 %v1141, 1.0
        %v1144 = vmul.f32 %v1051, %v1142
        %v1145 = vmul.f32 %v1052, %v1143
        %v1146 = vld [vmem:[%s7] sm:$0xff]
        %v1147 = vld [vmem:[%s7 + $0x8] sm:$0xff]
        %v1148 = vld [vmem:[%s7 + $0x10] sm:$0xff]
        %v1149 = vld [vmem:[%s7 + $0x18] sm:$0xff]
        %v1150 = vld [vmem:[%s7 + $0x20] sm:$0xff]
        %v1151 = vld [vmem:[%s7 + $0x28] sm:$0xff]
        %v1152 = vld [vmem:[%s7 + $0x30] sm:$0xff]
        %v1153 = vld [vmem:[%s7 + $0x38] sm:$0xff]
        %v1154 = vld [vmem:[%s8] sm:$0x1]
        %v1156 = vperm.slane %v1154, 0
        %vm1158 = vcmask 523264
        %v1160 = vsel %vm1158, %v1144, 0
        %v1163 = vsel %vm1158, %v1145, 0
        %1165 = vmatpush.msra.mxu0 0.0
        %1166 = vmatpush.msra.mxu0 0.0
        %1167 = vmatpush.msra.mxu0 0.0
        %1168 = vmatpush.msra.mxu0 0.0
        %1169 = vmatpush.msra.mxu0 0.0
        %1170 = vmatpush.msra.mxu0 0.0
        %1171 = vmatpush.msra.mxu0 0.0
        %1172 = vmatpush.msra.mxu0 0.0
        %1173 = vmatpush.msra.mxu0 %v1153
        %1174 = vmatpush.msra.mxu0 %v1152
        %1175 = vmatpush.msra.mxu0 %v1151
        %1176 = vmatpush.msra.mxu0 %v1150
        %1177 = vmatpush.msra.mxu0 %v1149
        %1178 = vmatpush.msra.mxu0 %v1148
        %1179 = vmatpush.msra.mxu0 %v1147
        %1180 = vmatpush.msra.mxu0 %v1146
        %1181 = vmatmul.f32.gmra.mxu0 %v1160
        %v1182 = vpop.f32.mrf.mxu0
        %v1183 = vadd.f32 %v1156, %v1182
        %1184 = vmatmul.f32.gmra.mxu0 %v1163
        %v1185 = vpop.f32.mrf.mxu0
        %v1186 = vadd.f32 %v1156, %v1185
        %1187 = vdwg.mxu0
        %v1188 = vadd.f32 %v349, %v1183
        %v1189 = vadd.f32 %v350, %v1186
        %1190 = vst.msk [vmem:[%s341] sm:$0xff] %vm351, %v1188
        %1191 = vst.msk [vmem:[%s341 + $0x8] sm:$0xff] %vm351, %v1189
        %s1192 = sand.u32 %s226, 1
        %s1193 = scalar_lea.sflag [#allocation4], %s1192
        %s1194 = sand.u32 %s226, 1
        %s1195 = smul.addr %s1194, 16
        %s1196 = scalar_lea.vmem [#allocation5], %s1195
        // Predicated region
        $region61: #{tpu_custom_call.1} parent=55 // pred_check
          %p1197 = pneg %p236
        $region62: #{tpu_custom_call.1} parent=55 // pred_check_branch
          %1199 = sbr.rel (%p1197) target = $region64
        $region63: #{tpu_custom_call.1} parent=55 // pred_region
          %s1200 = smul.u32 2, %s24
          %1202 = vsyncadd %s1193, 0
          %s1203 = smul.addr %s1200, 8
          %s1204 = scalar_lea.hbm %s9, %s1203
          %s1205 = sshll.u32 %s1196, 4
          %s1206 = int_to_ptr.vmem [resolvable:$true] %s1205
          %s1207 = sshll.u32 %s1204, 4
          %s1208 = int_to_ptr.hbm [resolvable:$true] %s1207
          %1213 = dma.vmem_to_hbm [thread:$0]  %s1206, 256, %s1208, %s1193, 128, 128, 8
        $region64: #{tpu_custom_call.1} parent=55 // pred_fallthru
          _
      $region56: #{tpu_custom_call.1} parent=5 // pred_fallthru
        _
      %p1214 = scmp.le.s32.totalorder 2, %s19
      // Predicated region
      $region65: #{tpu_custom_call.1} parent=5 // pred_check
        %p1215 = pneg %p1214
      $region66: #{tpu_custom_call.1} parent=5 // pred_check_branch
        %1217 = sbr.rel (%p1215) target = $region68
      $region67: #{tpu_custom_call.1} parent=5 // pred_region
        %s1218 = ssub.s32 %s19, 2
        // Predicated region
        $region69: #{tpu_custom_call.1} parent=67 // pred_check
          %p1219 = pneg %p242
        $region70: #{tpu_custom_call.1} parent=67 // pred_check_branch
          %1221 = sbr.rel (%p1219) target = $region72
        $region71: #{tpu_custom_call.1} parent=67 // pred_region
          %s1222 = sand.u32 %s227, 1
          %s1223 = scalar_lea.sflag [#allocation4], %s1222
          %s1224 = sand.u32 %s227, 1
          %s1225 = smul.addr %s1224, 16
          %s1226 = scalar_lea.vmem [#allocation5], %s1225
          %1228 = dma.done %s1223, 256
        $region72: #{tpu_custom_call.1} parent=67 // pred_fallthru
          _
      $region68: #{tpu_custom_call.1} parent=5 // pred_fallthru
        _
    $region6: #{tpu_custom_call.1} parent=1 // loop_footer
      %s23 = sadd.s32 1, %s19
    $region7: #{tpu_custom_call.1} parent=1 // loop_footer_branch
      %18 = sbr.rel target = $region3
    $region8: #{tpu_custom_call.1} parent=1 // loop_exit
      _
    %1229 = vsyncpa [#allocation3], 1
    %s1230 = scalar_lea.sflag [#allocation3], 1
    %1231 = vsyncpa %s1230, 1
    %1232 = vsyncpa [#allocation4], 1
    %s1233 = scalar_lea.sflag [#allocation4], 1
    %1234 = vsyncpa %s1233, 1

</llo_original>
